<compile_context>
chip_gen: v7x
topology: tpu7x:2x2x1
jax: 0.10.0
libtpu: 0.0.40
codegen_flags: <defaults>
</compile_context>

<pallas_src>
import functools

import jax
import jax.numpy as jnp
from jax.experimental import pallas as pl
from jax.experimental.pallas import tpu as pltpu

LEAK = 0.2
EPS = 1e-8


def _leaky(x):
    return jnp.where(x > 0, x, LEAK * x)


# ---------------------------------------------------------------------------
# Single fused kernel: one batch element per grid step.
# ---------------------------------------------------------------------------
def resblock_kernel(x_ref, rc_ref, w1_ref, b1_ref, w2_ref, b2_ref, wsc_ref,
                    bsc_ref, o_ref, *, H, W):
    # x_ref  : (1, Cin, HW)    f32, NCHW with spatial dims flattened onto lanes
    # rc_ref : (2, HW)         int32, row 0 = column index j, row 1 = row index i
    # w1_ref : (9, Cout, Cin)  bf16, per-tap conv1 weights (WeightScale folded)
    # b1_ref : (Cout, 1)       f32
    # w2_ref : (9, Cout, Cout) bf16, per-tap conv2 weights (WeightScale folded)
    # b2_ref : (Cout, 1)       f32
    # wsc_ref: (Cout, Cin)     bf16, 1x1 shortcut weight
    # bsc_ref: (Cout, 1)       f32
    # o_ref  : (1, Cout, HW)   f32
    HW = H * W
    x = x_ref[0]                                   # (Cin, HW) f32

    col = rc_ref[0:1, :]                           # (1, HW) int32
    row = rc_ref[1:2, :]                           # (1, HW) int32
    is_c0 = col == 0
    is_cL = col == (W - 1)
    is_r0 = row == 0
    is_rL = row == (H - 1)

    def shift(a, off):
        # out[:, idx] == a[:, idx + off] (circular).  The lanes contaminated by
        # the circular wrap are exactly the reflection-boundary lanes, which
        # the `jnp.where`s below always replace / never select.
        return pltpu.roll(a, (-off) % HW, 1)

    def conv3x3_pn_lrelu(v, w_ref, b_ref):
        # v: (C, HW) f32 lane-dense.  Reflection-padded 3x3 conv as 9 shifted
        # matmuls accumulated in f32, then PixelNorm (rsqrt -> EUP) + LeakyReLU.
        v_l = shift(v, -1)                         # value at column j-1
        v_r = shift(v, +1)                         # value at column j+1
        col_var = {
            -1: jnp.where(is_c0, v_r, v_l),        # reflect: j==0   -> column 1
            0: v,
            +1: jnp.where(is_cL, v_l, v_r),        # reflect: j==W-1 -> column W-2
        }
        taps = {}
        for ox in (-1, 0, 1):
            u = col_var[ox]
            u_up = shift(u, -W)                    # value at row i-1
            u_dn = shift(u, +W)                    # value at row i+1
            taps[(-1, ox)] = jnp.where(is_r0, u_dn, u_up)   # reflect top row
            taps[(0, ox)] = u
            taps[(+1, ox)] = jnp.where(is_rL, u_up, u_dn)   # reflect bottom row

        acc = None
        for dy in range(3):
            for dx in range(3):
                k = dy * 3 + dx                    # tap index, matches weight layout
                part = jnp.dot(w_ref[k],
                               taps[(dy - 1, dx - 1)].astype(jnp.bfloat16),
                               preferred_element_type=jnp.float32)
                acc = part if acc is None else acc + part
        y = acc + b_ref[...]
        ms = jnp.mean(y * y, axis=0, keepdims=True)   # PixelNorm over channels
        y = y * jax.lax.rsqrt(ms + EPS)
        return _leaky(y)

    h = conv3x3_pn_lrelu(x, w1_ref, b1_ref)        # conv1 + relu1
    h = conv3x3_pn_lrelu(h, w2_ref, b2_ref)        # conv2 + relu2

    # 1x1 shortcut (no WeightScale / PixelNorm) + residual add + relu3.
    sc = jnp.dot(wsc_ref[...], x.astype(jnp.bfloat16),
                 preferred_element_type=jnp.float32) + bsc_ref[...]
    o_ref[0] = _leaky(h + sc)                      # (Cout, HW), lane-dense store


# ---------------------------------------------------------------------------
# Wrapper: NCHW in / NCHW out (PyTorch convention).  Only free reshapes and
# tiny weight re-layouts on the host side.
# ---------------------------------------------------------------------------
def resblock_forward(x_nchw, params):
    N, Cin, H, W = x_nchw.shape
    assert H >= 2 and W >= 2, "ReflectionPad2d(1) needs H, W >= 2"
    Cout = params["b1"].shape[0]
    HW = H * W

    # Fold WeightScale into the conv weights (conv is linear; bias unaffected)
    # and re-layout 3x3 HWIO weights as per-tap stacks (9, Cout, Cin):
    # w_taps[dy*3+dx, o, i] = w[dy, dx, i, o] / c.  Cast to bf16 for native MXU
    # cadence; accumulation stays f32 inside the kernel.
    c1 = (Cin * H * W / 2.0) ** 0.5
    c2 = (Cout * H * W / 2.0) ** 0.5
    w1t = (jnp.transpose(params["w1"], (0, 1, 3, 2)) / c1
           ).reshape(9, Cout, Cin).astype(jnp.bfloat16)
    w2t = (jnp.transpose(params["w2"], (0, 1, 3, 2)) / c2
           ).reshape(9, Cout, Cout).astype(jnp.bfloat16)
    wsc = params["wsc"].T.astype(jnp.bfloat16)               # (Cout, Cin)
    b1 = params["b1"].reshape(Cout, 1).astype(jnp.float32)
    b2 = params["b2"].reshape(Cout, 1).astype(jnp.float32)
    bsc = params["bsc"].reshape(Cout, 1).astype(jnp.float32)

    # Host-computed column / row indices of each flat lane position (avoids
    # vector integer div/mod inside the kernel).
    idx = jnp.arange(HW, dtype=jnp.int32)
    rc = jnp.stack([idx % W, idx // W], axis=0)               # (2, HW) int32

    x_flat = x_nchw.reshape(N, Cin, HW)                       # free reshape

    kernel = functools.partial(resblock_kernel, H=H, W=W)
    y = pl.pallas_call(
        kernel,
        out_shape=jax.ShapeDtypeStruct((N, Cout, HW), jnp.float32),
        grid=(N,),
        in_specs=[
            pl.BlockSpec((1, Cin, HW), lambda n: (n, 0, 0)),
            pl.BlockSpec((2, HW), lambda n: (0, 0)),
            pl.BlockSpec((9, Cout, Cin), lambda n: (0, 0, 0)),
            pl.BlockSpec((Cout, 1), lambda n: (0, 0)),
            pl.BlockSpec((9, Cout, Cout), lambda n: (0, 0, 0)),
            pl.BlockSpec((Cout, 1), lambda n: (0, 0)),
            pl.BlockSpec((Cout, Cin), lambda n: (0, 0)),
            pl.BlockSpec((Cout, 1), lambda n: (0, 0)),
        ],
        out_specs=pl.BlockSpec((1, Cout, HW), lambda n: (n, 0, 0)),
        compiler_params=pltpu.CompilerParams(
            dimension_semantics=("parallel",)),
    )(x_flat, rc, w1t, b1, w2t, b2, wsc, bsc)

    return y.reshape(N, Cout, H, W)                            # NCHW, free reshape


# ---------------------------------------------------------------------------
# Pure-JAX reference (mirrors the PyTorch math, f32 HIGHEST precision).
# ---------------------------------------------------------------------------
def reference_nhwc(x, params):
    def conv_blk(v, w, b):
        _, H, W, C = v.shape
        c = (C * H * W / 2.0) ** 0.5
        v = v / c
        vp = jnp.pad(v, ((0, 0), (1, 1), (1, 1), (0, 0)), mode="reflect")
        y = jax.lax.conv_general_dilated(
            vp, w, (1, 1), "VALID",
            dimension_numbers=("NHWC", "HWIO", "NHWC"),
            precision=jax.lax.Precision.HIGHEST,
        ) + b
        ms = jnp.mean(y * y, axis=-1, keepdims=True)
        return y / jnp.sqrt(ms + EPS)

    h = _leaky(conv_blk(x, params["w1"], params["b1"]))
    h = _leaky(conv_blk(h, params["w2"], params["b2"]))
    sc = jnp.einsum("nhwc,cd->nhwd", x, params["wsc"],
                    precision=jax.lax.Precision.HIGHEST) + params["bsc"]
    return _leaky(h + sc)


if __name__ == "__main__":
    N, Cin, Cout, H, W = 2, 4, 8, 16, 16

    key = jax.random.PRNGKey(0)
    k1, k2, k3, k4, k5, k6, kx = jax.random.split(key, 7)

    # Deterministic, kaiming-normal-like inits (fan_in = Cin * k * k)
    params = {
        "w1": jax.random.normal(k1, (3, 3, Cin, Cout), jnp.float32)
              * (2.0 / (Cin * 9)) ** 0.5,
        "b1": jax.random.uniform(k2, (Cout,), jnp.float32, -0.1, 0.1),
        "w2": jax.random.normal(k3, (3, 3, Cout, Cout), jnp.float32)
              * (2.0 / (Cout * 9)) ** 0.5,
        "b2": jax.random.uniform(k4, (Cout,), jnp.float32, -0.1, 0.1),
        "wsc": jax.random.normal(k5, (Cin, Cout), jnp.float32)
               * (1.0 / Cin) ** 0.5,
        "bsc": jax.random.uniform(k6, (Cout,), jnp.float32, -0.1, 0.1),
    }

    x = jax.random.normal(kx, (N, Cin, H, W), jnp.float32)   # NCHW, like PyTorch

    y = resblock_forward(x, params)
    y = jax.block_until_ready(y)

    # Correctness check against the f32-HIGHEST reference of the torch math.
    # (Kernel matmuls use bf16 operands / f32 accumulation, so allow
    #  bf16-pass-level error.)
    ref = reference_nhwc(jnp.transpose(x, (0, 2, 3, 1)), params)
    ref = jnp.transpose(ref, (0, 3, 1, 2))
    assert y.shape == (N, Cout, H, W)
    assert jnp.allclose(y, ref, atol=2e-2, rtol=2e-2), "mismatch vs reference"

    print("KERNEL_OK")
</pallas_src>

<mosaic_0001>
module attributes {stable_mosaic.version = 11 : i64} {
  func.func @resblock_kernel(%arg0: i32, %arg1: memref<1x4x256xf32, #tpu.memory_space<vmem>>, %arg2: memref<2x256xi32, #tpu.memory_space<vmem>>, %arg3: memref<9x8x4xbf16, #tpu.memory_space<vmem>>, %arg4: memref<8x1xf32, #tpu.memory_space<vmem>>, %arg5: memref<9x8x8xbf16, #tpu.memory_space<vmem>>, %arg6: memref<8x1xf32, #tpu.memory_space<vmem>>, %arg7: memref<8x4xbf16, #tpu.memory_space<vmem>>, %arg8: memref<8x1xf32, #tpu.memory_space<vmem>>, %arg9: memref<1x8x256xf32, #tpu.memory_space<vmem>>) attributes {dimension_semantics = [#tpu.dimension_semantics<parallel>], iteration_bounds = array<i64: 2>, scalar_prefetch = 0 : i64, scratch_operands = 0 : i64, tpu.core_type = #tpu.core_type<tc>, window_params = [{transform_indices = @transform_0, window_bounds = array<i64: 1, 4, 256>}, {pipeline_mode = #tpu.pipeline_mode<synchronous>, transform_indices = @transform_1, window_bounds = array<i64: 2, 256>}, {pipeline_mode = #tpu.pipeline_mode<synchronous>, transform_indices = @transform_2, window_bounds = array<i64: 9, 8, 4>}, {pipeline_mode = #tpu.pipeline_mode<synchronous>, transform_indices = @transform_3, window_bounds = array<i64: 8, 1>}, {pipeline_mode = #tpu.pipeline_mode<synchronous>, transform_indices = @transform_4, window_bounds = array<i64: 9, 8, 8>}, {pipeline_mode = #tpu.pipeline_mode<synchronous>, transform_indices = @transform_5, window_bounds = array<i64: 8, 1>}, {pipeline_mode = #tpu.pipeline_mode<synchronous>, transform_indices = @transform_6, window_bounds = array<i64: 8, 4>}, {pipeline_mode = #tpu.pipeline_mode<synchronous>, transform_indices = @transform_7, window_bounds = array<i64: 8, 1>}, {transform_indices = @transform_8, window_bounds = array<i64: 1, 8, 256>}]} {
    %c0 = arith.constant 0 : index
    %c0_0 = arith.constant 0 : index
    %c0_1 = arith.constant 0 : index
    %0 = vector.load %arg1[%c0, %c0_0, %c0_1] : memref<1x4x256xf32, #tpu.memory_space<vmem>>, vector<1x4x256xf32>
    %1 = vector.shape_cast %0 : vector<1x4x256xf32> to vector<4x256xf32>
    %c0_2 = arith.constant 0 : index
    %c0_3 = arith.constant 0 : index
    %2 = vector.load %arg2[%c0_2, %c0_3] : memref<2x256xi32, #tpu.memory_space<vmem>>, vector<1x256xi32>
    %c1 = arith.constant 1 : index
    %c0_4 = arith.constant 0 : index
    %3 = vector.load %arg2[%c1, %c0_4] : memref<2x256xi32, #tpu.memory_space<vmem>>, vector<1x256xi32>
    %c0_i32 = arith.constant 0 : i32
    %4 = vector.broadcast %c0_i32 : i32 to vector<1x256xi32>
    %5 = arith.cmpi eq, %2, %4 : vector<1x256xi32>
    %c15_i32 = arith.constant 15 : i32
    %6 = vector.broadcast %c15_i32 : i32 to vector<1x256xi32>
    %7 = arith.cmpi eq, %2, %6 : vector<1x256xi32>
    %c0_i32_5 = arith.constant 0 : i32
    %8 = vector.broadcast %c0_i32_5 : i32 to vector<1x256xi32>
    %9 = arith.cmpi eq, %3, %8 : vector<1x256xi32>
    %c15_i32_6 = arith.constant 15 : i32
    %10 = vector.broadcast %c15_i32_6 : i32 to vector<1x256xi32>
    %11 = arith.cmpi eq, %3, %10 : vector<1x256xi32>
    %c1_i32 = arith.constant 1 : i32
    %12 = tpu.dynamic_rotate %1 by %c1_i32 dim 1 : vector<4x256xf32>, i32 -> vector<4x256xf32>
    %c255_i32 = arith.constant 255 : i32
    %13 = tpu.dynamic_rotate %1 by %c255_i32 dim 1 : vector<4x256xf32>, i32 -> vector<4x256xf32>
    %14 = vector.shape_cast %5 : vector<1x256xi1> to vector<1x256xi1>
    %15 = vector.broadcast %14 : vector<1x256xi1> to vector<4x256xi1>
    %16 = arith.select %15, %13, %12 : vector<4x256xi1>, vector<4x256xf32>
    %17 = vector.shape_cast %7 : vector<1x256xi1> to vector<1x256xi1>
    %18 = vector.broadcast %17 : vector<1x256xi1> to vector<4x256xi1>
    %19 = arith.select %18, %12, %13 : vector<4x256xi1>, vector<4x256xf32>
    %c16_i32 = arith.constant 16 : i32
    %20 = tpu.dynamic_rotate %16 by %c16_i32 dim 1 : vector<4x256xf32>, i32 -> vector<4x256xf32>
    %c240_i32 = arith.constant 240 : i32
    %21 = tpu.dynamic_rotate %16 by %c240_i32 dim 1 : vector<4x256xf32>, i32 -> vector<4x256xf32>
    %22 = vector.shape_cast %9 : vector<1x256xi1> to vector<1x256xi1>
    %23 = vector.broadcast %22 : vector<1x256xi1> to vector<4x256xi1>
    %24 = arith.select %23, %21, %20 : vector<4x256xi1>, vector<4x256xf32>
    %25 = vector.shape_cast %11 : vector<1x256xi1> to vector<1x256xi1>
    %26 = vector.broadcast %25 : vector<1x256xi1> to vector<4x256xi1>
    %27 = arith.select %26, %20, %21 : vector<4x256xi1>, vector<4x256xf32>
    %c16_i32_7 = arith.constant 16 : i32
    %28 = tpu.dynamic_rotate %1 by %c16_i32_7 dim 1 : vector<4x256xf32>, i32 -> vector<4x256xf32>
    %c240_i32_8 = arith.constant 240 : i32
    %29 = tpu.dynamic_rotate %1 by %c240_i32_8 dim 1 : vector<4x256xf32>, i32 -> vector<4x256xf32>
    %30 = vector.shape_cast %9 : vector<1x256xi1> to vector<1x256xi1>
    %31 = vector.broadcast %30 : vector<1x256xi1> to vector<4x256xi1>
    %32 = arith.select %31, %29, %28 : vector<4x256xi1>, vector<4x256xf32>
    %33 = vector.shape_cast %11 : vector<1x256xi1> to vector<1x256xi1>
    %34 = vector.broadcast %33 : vector<1x256xi1> to vector<4x256xi1>
    %35 = arith.select %34, %28, %29 : vector<4x256xi1>, vector<4x256xf32>
    %c16_i32_9 = arith.constant 16 : i32
    %36 = tpu.dynamic_rotate %19 by %c16_i32_9 dim 1 : vector<4x256xf32>, i32 -> vector<4x256xf32>
    %c240_i32_10 = arith.constant 240 : i32
    %37 = tpu.dynamic_rotate %19 by %c240_i32_10 dim 1 : vector<4x256xf32>, i32 -> vector<4x256xf32>
    %38 = vector.shape_cast %9 : vector<1x256xi1> to vector<1x256xi1>
    %39 = vector.broadcast %38 : vector<1x256xi1> to vector<4x256xi1>
    %40 = arith.select %39, %37, %36 : vector<4x256xi1>, vector<4x256xf32>
    %41 = vector.shape_cast %11 : vector<1x256xi1> to vector<1x256xi1>
    %42 = vector.broadcast %41 : vector<1x256xi1> to vector<4x256xi1>
    %43 = arith.select %42, %36, %37 : vector<4x256xi1>, vector<4x256xf32>
    %c0_11 = arith.constant 0 : index
    %c0_12 = arith.constant 0 : index
    %c0_13 = arith.constant 0 : index
    %44 = vector.load %arg3[%c0_11, %c0_12, %c0_13] : memref<9x8x4xbf16, #tpu.memory_space<vmem>>, vector<1x8x4xbf16>
    %45 = vector.shape_cast %44 : vector<1x8x4xbf16> to vector<8x4xbf16>
    %46 = arith.truncf %24 : vector<4x256xf32> to vector<4x256xbf16>
    %cst = arith.constant dense<0.000000e+00> : vector<8x256xf32>
    %47 = tpu.matmul %45, %46, %cst {dimension_numbers = #tpu.dot_dimension_numbers<[1], [0], [0], [1], [0, 0, 1, 1], [], []>} : vector<8x4xbf16>, vector<4x256xbf16>, vector<8x256xf32> -> vector<8x256xf32>
    %c1_14 = arith.constant 1 : index
    %c0_15 = arith.constant 0 : index
    %c0_16 = arith.constant 0 : index
    %48 = vector.load %arg3[%c1_14, %c0_15, %c0_16] : memref<9x8x4xbf16, #tpu.memory_space<vmem>>, vector<1x8x4xbf16>
    %49 = vector.shape_cast %48 : vector<1x8x4xbf16> to vector<8x4xbf16>
    %50 = arith.truncf %32 : vector<4x256xf32> to vector<4x256xbf16>
    %cst_17 = arith.constant dense<0.000000e+00> : vector<8x256xf32>
    %51 = tpu.matmul %49, %50, %cst_17 {dimension_numbers = #tpu.dot_dimension_numbers<[1], [0], [0], [1], [0, 0, 1, 1], [], []>} : vector<8x4xbf16>, vector<4x256xbf16>, vector<8x256xf32> -> vector<8x256xf32>
    %52 = arith.addf %47, %51 : vector<8x256xf32>
    %c2 = arith.constant 2 : index
    %c0_18 = arith.constant 0 : index
    %c0_19 = arith.constant 0 : index
    %53 = vector.load %arg3[%c2, %c0_18, %c0_19] : memref<9x8x4xbf16, #tpu.memory_space<vmem>>, vector<1x8x4xbf16>
    %54 = vector.shape_cast %53 : vector<1x8x4xbf16> to vector<8x4xbf16>
    %55 = arith.truncf %40 : vector<4x256xf32> to vector<4x256xbf16>
    %cst_20 = arith.constant dense<0.000000e+00> : vector<8x256xf32>
    %56 = tpu.matmul %54, %55, %cst_20 {dimension_numbers = #tpu.dot_dimension_numbers<[1], [0], [0], [1], [0, 0, 1, 1], [], []>} : vector<8x4xbf16>, vector<4x256xbf16>, vector<8x256xf32> -> vector<8x256xf32>
    %57 = arith.addf %52, %56 : vector<8x256xf32>
    %c3 = arith.constant 3 : index
    %c0_21 = arith.constant 0 : index
    %c0_22 = arith.constant 0 : index
    %58 = vector.load %arg3[%c3, %c0_21, %c0_22] : memref<9x8x4xbf16, #tpu.memory_space<vmem>>, vector<1x8x4xbf16>
    %59 = vector.shape_cast %58 : vector<1x8x4xbf16> to vector<8x4xbf16>
    %60 = arith.truncf %16 : vector<4x256xf32> to vector<4x256xbf16>
    %cst_23 = arith.constant dense<0.000000e+00> : vector<8x256xf32>
    %61 = tpu.matmul %59, %60, %cst_23 {dimension_numbers = #tpu.dot_dimension_numbers<[1], [0], [0], [1], [0, 0, 1, 1], [], []>} : vector<8x4xbf16>, vector<4x256xbf16>, vector<8x256xf32> -> vector<8x256xf32>
    %62 = arith.addf %57, %61 : vector<8x256xf32>
    %c4 = arith.constant 4 : index
    %c0_24 = arith.constant 0 : index
    %c0_25 = arith.constant 0 : index
    %63 = vector.load %arg3[%c4, %c0_24, %c0_25] : memref<9x8x4xbf16, #tpu.memory_space<vmem>>, vector<1x8x4xbf16>
    %64 = vector.shape_cast %63 : vector<1x8x4xbf16> to vector<8x4xbf16>
    %65 = arith.truncf %1 : vector<4x256xf32> to vector<4x256xbf16>
    %cst_26 = arith.constant dense<0.000000e+00> : vector<8x256xf32>
    %66 = tpu.matmul %64, %65, %cst_26 {dimension_numbers = #tpu.dot_dimension_numbers<[1], [0], [0], [1], [0, 0, 1, 1], [], []>} : vector<8x4xbf16>, vector<4x256xbf16>, vector<8x256xf32> -> vector<8x256xf32>
    %67 = arith.addf %62, %66 : vector<8x256xf32>
    %c5 = arith.constant 5 : index
    %c0_27 = arith.constant 0 : index
    %c0_28 = arith.constant 0 : index
    %68 = vector.load %arg3[%c5, %c0_27, %c0_28] : memref<9x8x4xbf16, #tpu.memory_space<vmem>>, vector<1x8x4xbf16>
    %69 = vector.shape_cast %68 : vector<1x8x4xbf16> to vector<8x4xbf16>
    %70 = arith.truncf %19 : vector<4x256xf32> to vector<4x256xbf16>
    %cst_29 = arith.constant dense<0.000000e+00> : vector<8x256xf32>
    %71 = tpu.matmul %69, %70, %cst_29 {dimension_numbers = #tpu.dot_dimension_numbers<[1], [0], [0], [1], [0, 0, 1, 1], [], []>} : vector<8x4xbf16>, vector<4x256xbf16>, vector<8x256xf32> -> vector<8x256xf32>
    %72 = arith.addf %67, %71 : vector<8x256xf32>
    %c6 = arith.constant 6 : index
    %c0_30 = arith.constant 0 : index
    %c0_31 = arith.constant 0 : index
    %73 = vector.load %arg3[%c6, %c0_30, %c0_31] : memref<9x8x4xbf16, #tpu.memory_space<vmem>>, vector<1x8x4xbf16>
    %74 = vector.shape_cast %73 : vector<1x8x4xbf16> to vector<8x4xbf16>
    %75 = arith.truncf %27 : vector<4x256xf32> to vector<4x256xbf16>
    %cst_32 = arith.constant dense<0.000000e+00> : vector<8x256xf32>
    %76 = tpu.matmul %74, %75, %cst_32 {dimension_numbers = #tpu.dot_dimension_numbers<[1], [0], [0], [1], [0, 0, 1, 1], [], []>} : vector<8x4xbf16>, vector<4x256xbf16>, vector<8x256xf32> -> vector<8x256xf32>
    %77 = arith.addf %72, %76 : vector<8x256xf32>
    %c7 = arith.constant 7 : index
    %c0_33 = arith.constant 0 : index
    %c0_34 = arith.constant 0 : index
    %78 = vector.load %arg3[%c7, %c0_33, %c0_34] : memref<9x8x4xbf16, #tpu.memory_space<vmem>>, vector<1x8x4xbf16>
    %79 = vector.shape_cast %78 : vector<1x8x4xbf16> to vector<8x4xbf16>
    %80 = arith.truncf %35 : vector<4x256xf32> to vector<4x256xbf16>
    %cst_35 = arith.constant dense<0.000000e+00> : vector<8x256xf32>
    %81 = tpu.matmul %79, %80, %cst_35 {dimension_numbers = #tpu.dot_dimension_numbers<[1], [0], [0], [1], [0, 0, 1, 1], [], []>} : vector<8x4xbf16>, vector<4x256xbf16>, vector<8x256xf32> -> vector<8x256xf32>
    %82 = arith.addf %77, %81 : vector<8x256xf32>
    %c8 = arith.constant 8 : index
    %c0_36 = arith.constant 0 : index
    %c0_37 = arith.constant 0 : index
    %83 = vector.load %arg3[%c8, %c0_36, %c0_37] : memref<9x8x4xbf16, #tpu.memory_space<vmem>>, vector<1x8x4xbf16>
    %84 = vector.shape_cast %83 : vector<1x8x4xbf16> to vector<8x4xbf16>
    %85 = arith.truncf %43 : vector<4x256xf32> to vector<4x256xbf16>
    %cst_38 = arith.constant dense<0.000000e+00> : vector<8x256xf32>
    %86 = tpu.matmul %84, %85, %cst_38 {dimension_numbers = #tpu.dot_dimension_numbers<[1], [0], [0], [1], [0, 0, 1, 1], [], []>} : vector<8x4xbf16>, vector<4x256xbf16>, vector<8x256xf32> -> vector<8x256xf32>
    %87 = arith.addf %82, %86 : vector<8x256xf32>
    %c0_39 = arith.constant 0 : index
    %c0_40 = arith.constant 0 : index
    %88 = vector.load %arg4[%c0_39, %c0_40] : memref<8x1xf32, #tpu.memory_space<vmem>>, vector<8x1xf32>
    %89 = vector.broadcast %88 : vector<8x1xf32> to vector<8x256xf32>
    %90 = arith.addf %87, %89 : vector<8x256xf32>
    %91 = arith.mulf %90, %90 : vector<8x256xf32>
    %cst_41 = arith.constant dense<0.000000e+00> : vector<256xf32>
    %92 = vector.multi_reduction <add>, %91, %cst_41 [0] : vector<8x256xf32> to vector<256xf32>
    %93 = vector.shape_cast %92 : vector<256xf32> to vector<1x256xf32>
    %cst_42 = arith.constant 8.000000e+00 : f32
    %94 = vector.broadcast %cst_42 : f32 to vector<1x256xf32>
    %95 = arith.divf %93, %94 : vector<1x256xf32>
    %cst_43 = arith.constant 9.99999993E-9 : f32
    %96 = vector.broadcast %cst_43 : f32 to vector<1x256xf32>
    %97 = arith.addf %95, %96 : vector<1x256xf32>
    %98 = math.rsqrt %97 : vector<1x256xf32>
    %99 = vector.broadcast %98 : vector<1x256xf32> to vector<8x256xf32>
    %100 = arith.mulf %90, %99 : vector<8x256xf32>
    %cst_44 = arith.constant 0.000000e+00 : f32
    %101 = vector.broadcast %cst_44 : f32 to vector<8x256xf32>
    %102 = arith.cmpf ogt, %100, %101 : vector<8x256xf32>
    %cst_45 = arith.constant 2.000000e-01 : f32
    %103 = vector.broadcast %cst_45 : f32 to vector<8x256xf32>
    %104 = arith.mulf %103, %100 : vector<8x256xf32>
    %105 = arith.select %102, %100, %104 : vector<8x256xi1>, vector<8x256xf32>
    %c1_i32_46 = arith.constant 1 : i32
    %106 = tpu.dynamic_rotate %105 by %c1_i32_46 dim 1 : vector<8x256xf32>, i32 -> vector<8x256xf32>
    %c255_i32_47 = arith.constant 255 : i32
    %107 = tpu.dynamic_rotate %105 by %c255_i32_47 dim 1 : vector<8x256xf32>, i32 -> vector<8x256xf32>
    %108 = vector.shape_cast %5 : vector<1x256xi1> to vector<1x256xi1>
    %109 = vector.broadcast %108 : vector<1x256xi1> to vector<8x256xi1>
    %110 = arith.select %109, %107, %106 : vector<8x256xi1>, vector<8x256xf32>
    %111 = vector.shape_cast %7 : vector<1x256xi1> to vector<1x256xi1>
    %112 = vector.broadcast %111 : vector<1x256xi1> to vector<8x256xi1>
    %113 = arith.select %112, %106, %107 : vector<8x256xi1>, vector<8x256xf32>
    %c16_i32_48 = arith.constant 16 : i32
    %114 = tpu.dynamic_rotate %110 by %c16_i32_48 dim 1 : vector<8x256xf32>, i32 -> vector<8x256xf32>
    %c240_i32_49 = arith.constant 240 : i32
    %115 = tpu.dynamic_rotate %110 by %c240_i32_49 dim 1 : vector<8x256xf32>, i32 -> vector<8x256xf32>
    %116 = vector.shape_cast %9 : vector<1x256xi1> to vector<1x256xi1>
    %117 = vector.broadcast %116 : vector<1x256xi1> to vector<8x256xi1>
    %118 = arith.select %117, %115, %114 : vector<8x256xi1>, vector<8x256xf32>
    %119 = vector.shape_cast %11 : vector<1x256xi1> to vector<1x256xi1>
    %120 = vector.broadcast %119 : vector<1x256xi1> to vector<8x256xi1>
    %121 = arith.select %120, %114, %115 : vector<8x256xi1>, vector<8x256xf32>
    %c16_i32_50 = arith.constant 16 : i32
    %122 = tpu.dynamic_rotate %105 by %c16_i32_50 dim 1 : vector<8x256xf32>, i32 -> vector<8x256xf32>
    %c240_i32_51 = arith.constant 240 : i32
    %123 = tpu.dynamic_rotate %105 by %c240_i32_51 dim 1 : vector<8x256xf32>, i32 -> vector<8x256xf32>
    %124 = vector.shape_cast %9 : vector<1x256xi1> to vector<1x256xi1>
    %125 = vector.broadcast %124 : vector<1x256xi1> to vector<8x256xi1>
    %126 = arith.select %125, %123, %122 : vector<8x256xi1>, vector<8x256xf32>
    %127 = vector.shape_cast %11 : vector<1x256xi1> to vector<1x256xi1>
    %128 = vector.broadcast %127 : vector<1x256xi1> to vector<8x256xi1>
    %129 = arith.select %128, %122, %123 : vector<8x256xi1>, vector<8x256xf32>
    %c16_i32_52 = arith.constant 16 : i32
    %130 = tpu.dynamic_rotate %113 by %c16_i32_52 dim 1 : vector<8x256xf32>, i32 -> vector<8x256xf32>
    %c240_i32_53 = arith.constant 240 : i32
    %131 = tpu.dynamic_rotate %113 by %c240_i32_53 dim 1 : vector<8x256xf32>, i32 -> vector<8x256xf32>
    %132 = vector.shape_cast %9 : vector<1x256xi1> to vector<1x256xi1>
    %133 = vector.broadcast %132 : vector<1x256xi1> to vector<8x256xi1>
    %134 = arith.select %133, %131, %130 : vector<8x256xi1>, vector<8x256xf32>
    %135 = vector.shape_cast %11 : vector<1x256xi1> to vector<1x256xi1>
    %136 = vector.broadcast %135 : vector<1x256xi1> to vector<8x256xi1>
    %137 = arith.select %136, %130, %131 : vector<8x256xi1>, vector<8x256xf32>
    %c0_54 = arith.constant 0 : index
    %c0_55 = arith.constant 0 : index
    %c0_56 = arith.constant 0 : index
    %138 = vector.load %arg5[%c0_54, %c0_55, %c0_56] : memref<9x8x8xbf16, #tpu.memory_space<vmem>>, vector<1x8x8xbf16>
    %139 = vector.shape_cast %138 : vector<1x8x8xbf16> to vector<8x8xbf16>
    %140 = arith.truncf %118 : vector<8x256xf32> to vector<8x256xbf16>
    %cst_57 = arith.constant dense<0.000000e+00> : vector<8x256xf32>
    %141 = tpu.matmul %139, %140, %cst_57 {dimension_numbers = #tpu.dot_dimension_numbers<[1], [0], [0], [1], [0, 0, 1, 1], [], []>} : vector<8x8xbf16>, vector<8x256xbf16>, vector<8x256xf32> -> vector<8x256xf32>
    %c1_58 = arith.constant 1 : index
    %c0_59 = arith.constant 0 : index
    %c0_60 = arith.constant 0 : index
    %142 = vector.load %arg5[%c1_58, %c0_59, %c0_60] : memref<9x8x8xbf16, #tpu.memory_space<vmem>>, vector<1x8x8xbf16>
    %143 = vector.shape_cast %142 : vector<1x8x8xbf16> to vector<8x8xbf16>
    %144 = arith.truncf %126 : vector<8x256xf32> to vector<8x256xbf16>
    %cst_61 = arith.constant dense<0.000000e+00> : vector<8x256xf32>
    %145 = tpu.matmul %143, %144, %cst_61 {dimension_numbers = #tpu.dot_dimension_numbers<[1], [0], [0], [1], [0, 0, 1, 1], [], []>} : vector<8x8xbf16>, vector<8x256xbf16>, vector<8x256xf32> -> vector<8x256xf32>
    %146 = arith.addf %141, %145 : vector<8x256xf32>
    %c2_62 = arith.constant 2 : index
    %c0_63 = arith.constant 0 : index
    %c0_64 = arith.constant 0 : index
    %147 = vector.load %arg5[%c2_62, %c0_63, %c0_64] : memref<9x8x8xbf16, #tpu.memory_space<vmem>>, vector<1x8x8xbf16>
    %148 = vector.shape_cast %147 : vector<1x8x8xbf16> to vector<8x8xbf16>
    %149 = arith.truncf %134 : vector<8x256xf32> to vector<8x256xbf16>
    %cst_65 = arith.constant dense<0.000000e+00> : vector<8x256xf32>
    %150 = tpu.matmul %148, %149, %cst_65 {dimension_numbers = #tpu.dot_dimension_numbers<[1], [0], [0], [1], [0, 0, 1, 1], [], []>} : vector<8x8xbf16>, vector<8x256xbf16>, vector<8x256xf32> -> vector<8x256xf32>
    %151 = arith.addf %146, %150 : vector<8x256xf32>
    %c3_66 = arith.constant 3 : index
    %c0_67 = arith.constant 0 : index
    %c0_68 = arith.constant 0 : index
    %152 = vector.load %arg5[%c3_66, %c0_67, %c0_68] : memref<9x8x8xbf16, #tpu.memory_space<vmem>>, vector<1x8x8xbf16>
    %153 = vector.shape_cast %152 : vector<1x8x8xbf16> to vector<8x8xbf16>
    %154 = arith.truncf %110 : vector<8x256xf32> to vector<8x256xbf16>
    %cst_69 = arith.constant dense<0.000000e+00> : vector<8x256xf32>
    %155 = tpu.matmul %153, %154, %cst_69 {dimension_numbers = #tpu.dot_dimension_numbers<[1], [0], [0], [1], [0, 0, 1, 1], [], []>} : vector<8x8xbf16>, vector<8x256xbf16>, vector<8x256xf32> -> vector<8x256xf32>
    %156 = arith.addf %151, %155 : vector<8x256xf32>
    %c4_70 = arith.constant 4 : index
    %c0_71 = arith.constant 0 : index
    %c0_72 = arith.constant 0 : index
    %157 = vector.load %arg5[%c4_70, %c0_71, %c0_72] : memref<9x8x8xbf16, #tpu.memory_space<vmem>>, vector<1x8x8xbf16>
    %158 = vector.shape_cast %157 : vector<1x8x8xbf16> to vector<8x8xbf16>
    %159 = arith.truncf %105 : vector<8x256xf32> to vector<8x256xbf16>
    %cst_73 = arith.constant dense<0.000000e+00> : vector<8x256xf32>
    %160 = tpu.matmul %158, %159, %cst_73 {dimension_numbers = #tpu.dot_dimension_numbers<[1], [0], [0], [1], [0, 0, 1, 1], [], []>} : vector<8x8xbf16>, vector<8x256xbf16>, vector<8x256xf32> -> vector<8x256xf32>
    %161 = arith.addf %156, %160 : vector<8x256xf32>
    %c5_74 = arith.constant 5 : index
    %c0_75 = arith.constant 0 : index
    %c0_76 = arith.constant 0 : index
    %162 = vector.load %arg5[%c5_74, %c0_75, %c0_76] : memref<9x8x8xbf16, #tpu.memory_space<vmem>>, vector<1x8x8xbf16>
    %163 = vector.shape_cast %162 : vector<1x8x8xbf16> to vector<8x8xbf16>
    %164 = arith.truncf %113 : vector<8x256xf32> to vector<8x256xbf16>
    %cst_77 = arith.constant dense<0.000000e+00> : vector<8x256xf32>
    %165 = tpu.matmul %163, %164, %cst_77 {dimension_numbers = #tpu.dot_dimension_numbers<[1], [0], [0], [1], [0, 0, 1, 1], [], []>} : vector<8x8xbf16>, vector<8x256xbf16>, vector<8x256xf32> -> vector<8x256xf32>
    %166 = arith.addf %161, %165 : vector<8x256xf32>
    %c6_78 = arith.constant 6 : index
    %c0_79 = arith.constant 0 : index
    %c0_80 = arith.constant 0 : index
    %167 = vector.load %arg5[%c6_78, %c0_79, %c0_80] : memref<9x8x8xbf16, #tpu.memory_space<vmem>>, vector<1x8x8xbf16>
    %168 = vector.shape_cast %167 : vector<1x8x8xbf16> to vector<8x8xbf16>
    %169 = arith.truncf %121 : vector<8x256xf32> to vector<8x256xbf16>
    %cst_81 = arith.constant dense<0.000000e+00> : vector<8x256xf32>
    %170 = tpu.matmul %168, %169, %cst_81 {dimension_numbers = #tpu.dot_dimension_numbers<[1], [0], [0], [1], [0, 0, 1, 1], [], []>} : vector<8x8xbf16>, vector<8x256xbf16>, vector<8x256xf32> -> vector<8x256xf32>
    %171 = arith.addf %166, %170 : vector<8x256xf32>
    %c7_82 = arith.constant 7 : index
    %c0_83 = arith.constant 0 : index
    %c0_84 = arith.constant 0 : index
    %172 = vector.load %arg5[%c7_82, %c0_83, %c0_84] : memref<9x8x8xbf16, #tpu.memory_space<vmem>>, vector<1x8x8xbf16>
    %173 = vector.shape_cast %172 : vector<1x8x8xbf16> to vector<8x8xbf16>
    %174 = arith.truncf %129 : vector<8x256xf32> to vector<8x256xbf16>
    %cst_85 = arith.constant dense<0.000000e+00> : vector<8x256xf32>
    %175 = tpu.matmul %173, %174, %cst_85 {dimension_numbers = #tpu.dot_dimension_numbers<[1], [0], [0], [1], [0, 0, 1, 1], [], []>} : vector<8x8xbf16>, vector<8x256xbf16>, vector<8x256xf32> -> vector<8x256xf32>
    %176 = arith.addf %171, %175 : vector<8x256xf32>
    %c8_86 = arith.constant 8 : index
    %c0_87 = arith.constant 0 : index
    %c0_88 = arith.constant 0 : index
    %177 = vector.load %arg5[%c8_86, %c0_87, %c0_88] : memref<9x8x8xbf16, #tpu.memory_space<vmem>>, vector<1x8x8xbf16>
    %178 = vector.shape_cast %177 : vector<1x8x8xbf16> to vector<8x8xbf16>
    %179 = arith.truncf %137 : vector<8x256xf32> to vector<8x256xbf16>
    %cst_89 = arith.constant dense<0.000000e+00> : vector<8x256xf32>
    %180 = tpu.matmul %178, %179, %cst_89 {dimension_numbers = #tpu.dot_dimension_numbers<[1], [0], [0], [1], [0, 0, 1, 1], [], []>} : vector<8x8xbf16>, vector<8x256xbf16>, vector<8x256xf32> -> vector<8x256xf32>
    %181 = arith.addf %176, %180 : vector<8x256xf32>
    %c0_90 = arith.constant 0 : index
    %c0_91 = arith.constant 0 : index
    %182 = vector.load %arg6[%c0_90, %c0_91] : memref<8x1xf32, #tpu.memory_space<vmem>>, vector<8x1xf32>
    %183 = vector.broadcast %182 : vector<8x1xf32> to vector<8x256xf32>
    %184 = arith.addf %181, %183 : vector<8x256xf32>
    %185 = arith.mulf %184, %184 : vector<8x256xf32>
    %cst_92 = arith.constant dense<0.000000e+00> : vector<256xf32>
    %186 = vector.multi_reduction <add>, %185, %cst_92 [0] : vector<8x256xf32> to vector<256xf32>
    %187 = vector.shape_cast %186 : vector<256xf32> to vector<1x256xf32>
    %cst_93 = arith.constant 8.000000e+00 : f32
    %188 = vector.broadcast %cst_93 : f32 to vector<1x256xf32>
    %189 = arith.divf %187, %188 : vector<1x256xf32>
    %cst_94 = arith.constant 9.99999993E-9 : f32
    %190 = vector.broadcast %cst_94 : f32 to vector<1x256xf32>
    %191 = arith.addf %189, %190 : vector<1x256xf32>
    %192 = math.rsqrt %191 : vector<1x256xf32>
    %193 = vector.broadcast %192 : vector<1x256xf32> to vector<8x256xf32>
    %194 = arith.mulf %184, %193 : vector<8x256xf32>
    %cst_95 = arith.constant 0.000000e+00 : f32
    %195 = vector.broadcast %cst_95 : f32 to vector<8x256xf32>
    %196 = arith.cmpf ogt, %194, %195 : vector<8x256xf32>
    %cst_96 = arith.constant 2.000000e-01 : f32
    %197 = vector.broadcast %cst_96 : f32 to vector<8x256xf32>
    %198 = arith.mulf %197, %194 : vector<8x256xf32>
    %199 = arith.select %196, %194, %198 : vector<8x256xi1>, vector<8x256xf32>
    %c0_97 = arith.constant 0 : index
    %c0_98 = arith.constant 0 : index
    %200 = vector.load %arg7[%c0_97, %c0_98] : memref<8x4xbf16, #tpu.memory_space<vmem>>, vector<8x4xbf16>
    %201 = arith.truncf %1 : vector<4x256xf32> to vector<4x256xbf16>
    %cst_99 = arith.constant dense<0.000000e+00> : vector<8x256xf32>
    %202 = tpu.matmul %200, %201, %cst_99 {dimension_numbers = #tpu.dot_dimension_numbers<[1], [0], [0], [1], [0, 0, 1, 1], [], []>} : vector<8x4xbf16>, vector<4x256xbf16>, vector<8x256xf32> -> vector<8x256xf32>
    %c0_100 = arith.constant 0 : index
    %c0_101 = arith.constant 0 : index
    %203 = vector.load %arg8[%c0_100, %c0_101] : memref<8x1xf32, #tpu.memory_space<vmem>>, vector<8x1xf32>
    %204 = vector.broadcast %203 : vector<8x1xf32> to vector<8x256xf32>
    %205 = arith.addf %202, %204 : vector<8x256xf32>
    %206 = arith.addf %199, %205 : vector<8x256xf32>
    %cst_102 = arith.constant 0.000000e+00 : f32
    %207 = vector.broadcast %cst_102 : f32 to vector<8x256xf32>
    %208 = arith.cmpf ogt, %206, %207 : vector<8x256xf32>
    %cst_103 = arith.constant 2.000000e-01 : f32
    %209 = vector.broadcast %cst_103 : f32 to vector<8x256xf32>
    %210 = arith.mulf %209, %206 : vector<8x256xf32>
    %211 = arith.select %208, %206, %210 : vector<8x256xi1>, vector<8x256xf32>
    %c0_104 = arith.constant 0 : index
    %c0_105 = arith.constant 0 : index
    %c0_106 = arith.constant 0 : index
    %212 = vector.load %arg9[%c0_104, %c0_105, %c0_106] : memref<1x8x256xf32, #tpu.memory_space<vmem>>, vector<1x8x256xf32>
    %213 = vector.shape_cast %212 : vector<1x8x256xf32> to vector<8x256xf32>
    %214 = vector.shape_cast %211 : vector<8x256xf32> to vector<1x8x256xf32>
    tpu.vector_store %arg9[%c0_104, %c0_105, %c0_106], %214 {strides = array<i32>} : memref<1x8x256xf32, #tpu.memory_space<vmem>>, vector<1x8x256xf32>,
    return
  }
  func.func @transform_0(%arg0: i32) -> (i32, i32, i32) {
    %c0_i32 = arith.constant 0 : i32
    %c0_i32_0 = arith.constant 0 : i32
    %c0_i32_1 = arith.constant 0 : i32
    return %arg0, %c0_i32, %c0_i32_0 : i32, i32, i32
  }
  func.func @transform_1(%arg0: i32) -> (i32, i32) {
    %c0_i32 = arith.constant 0 : i32
    %c0_i32_0 = arith.constant 0 : i32
    %c0_i32_1 = arith.constant 0 : i32
    return %c0_i32, %c0_i32_0 : i32, i32
  }
  func.func @transform_2(%arg0: i32) -> (i32, i32, i32) {
    %c0_i32 = arith.constant 0 : i32
    %c0_i32_0 = arith.constant 0 : i32
    %c0_i32_1 = arith.constant 0 : i32
    %c0_i32_2 = arith.constant 0 : i32
    return %c0_i32, %c0_i32_0, %c0_i32_1 : i32, i32, i32
  }
  func.func @transform_3(%arg0: i32) -> (i32, i32) {
    %c0_i32 = arith.constant 0 : i32
    %c0_i32_0 = arith.constant 0 : i32
    %c0_i32_1 = arith.constant 0 : i32
    return %c0_i32, %c0_i32_0 : i32, i32
  }
  func.func @transform_4(%arg0: i32) -> (i32, i32, i32) {
    %c0_i32 = arith.constant 0 : i32
    %c0_i32_0 = arith.constant 0 : i32
    %c0_i32_1 = arith.constant 0 : i32
    %c0_i32_2 = arith.constant 0 : i32
    return %c0_i32, %c0_i32_0, %c0_i32_1 : i32, i32, i32
  }
  func.func @transform_5(%arg0: i32) -> (i32, i32) {
    %c0_i32 = arith.constant 0 : i32
    %c0_i32_0 = arith.constant 0 : i32
    %c0_i32_1 = arith.constant 0 : i32
    return %c0_i32, %c0_i32_0 : i32, i32
  }
  func.func @transform_6(%arg0: i32) -> (i32, i32) {
    %c0_i32 = arith.constant 0 : i32
    %c0_i32_0 = arith.constant 0 : i32
    %c0_i32_1 = arith.constant 0 : i32
    return %c0_i32, %c0_i32_0 : i32, i32
  }
  func.func @transform_7(%arg0: i32) -> (i32, i32) {
    %c0_i32 = arith.constant 0 : i32
    %c0_i32_0 = arith.constant 0 : i32
    %c0_i32_1 = arith.constant 0 : i32
    return %c0_i32, %c0_i32_0 : i32, i32
  }
  func.func @transform_8(%arg0: i32) -> (i32, i32, i32) {
    %c0_i32 = arith.constant 0 : i32
    %c0_i32_0 = arith.constant 0 : i32
    %c0_i32_1 = arith.constant 0 : i32
    return %arg0, %c0_i32, %c0_i32_0 : i32, i32, i32
  }
}

</mosaic_0001>

<llo_original>
// kernel: tpu_custom_call.1
$region0: #{tpu_custom_call.1}
  #allocation0 [shape = 'u32[]', space=smem, size = 0x4, offset = 0x4, fixed_abs, tag = 'smem constant byte address 0x4 - core index']
  #allocation1 [shape = 'u32[144,128]{1,0:T(1,128)}', space=vmem, size = 0x12000, scoped, tag = 'internal scratch']
  %s0 = inlined_call_operand.vmem [shape: f32[2,4,256], index: 0, kind: input, shape index: {}]
  %s1 = inlined_call_operand.vmem [shape: s32[2,256], index: 1, kind: input, shape index: {}]
  %s2 = inlined_call_operand.vmem [shape: bf16[9,8,4], index: 2, kind: input, shape index: {}]
  %s3 = inlined_call_operand.vmem [shape: f32[8,1], index: 3, kind: input, shape index: {}]
  %s4 = inlined_call_operand.vmem [shape: bf16[9,8,8], index: 4, kind: input, shape index: {}]
  %s5 = inlined_call_operand.vmem [shape: f32[8,1], index: 5, kind: input, shape index: {}]
  %s6 = inlined_call_operand.vmem [shape: bf16[8,4], index: 6, kind: input, shape index: {}]
  %s7 = inlined_call_operand.vmem [shape: f32[8,1], index: 7, kind: input, shape index: {}]
  %s8 = inlined_call_operand.hbm [shape: f32[2,8,256], index: 8, kind: output, shape index: {}]
  %s9 = sld [smem:[#allocation0]]
  $region65: #{tpu_custom_call.1} parent=0
    _
  %s11 = ssub.s32 1, %s9
  %s12 = scalar_select 0, %s11, %s9
  $region1: #{tpu_custom_call.1} parent=0
    #allocation2 [shape = 'u8[16384]{0}', space=vmem, size = 0x4000, scoped, tag = 'output window, operand 0']
    #allocation3 [shape = 's32[2]{0}', space=sflag, size = 0x8, scoped, tag = 'scoped memory for tpu_custom_call.1']
    %13 = vsyncpa [#allocation3], 0
    %s14 = scalar_lea.sflag [#allocation3], 1
    %15 = vsyncpa %s14, 0
    loop: start=0, step=1, limit=4
    $region2: #{tpu_custom_call.1} parent=1 // loop_pre_header
      _
    $region3: #{tpu_custom_call.1} parent=1 // loop_header
      %s17 = sphi 0, %s21
      %p18 = scmp.ge.s32.totalorder %s17, 4
      %s27 = sphi 0, %s29
      %s30 = sphi 0, %s27
      %s31 = sphi 0, %s30
      %s47 = sphi 0, %s31
      %s51 = sphi 0, %s51
      %s53 = sphi 0, %s51
      %s54 = sphi 0, %s53
      %s68 = sphi 0, %s54
      %s72 = sphi 0, %s72
      %s74 = sphi 0, %s72
      %s75 = sphi 0, %s74
      %s89 = sphi 0, %s75
      %s93 = sphi 0, %s93
      %s95 = sphi 0, %s93
      %s96 = sphi 0, %s95
      %s110 = sphi 0, %s96
      %s114 = sphi 0, %s114
      %s116 = sphi 0, %s114
      %s117 = sphi 0, %s116
      %s131 = sphi 0, %s117
      %s135 = sphi 0, %s135
      %s137 = sphi 0, %s135
      %s138 = sphi 0, %s137
      %s152 = sphi 0, %s138
      %s156 = sphi 0, %s156
      %s158 = sphi 0, %s156
      %s159 = sphi 0, %s158
      %s173 = sphi 0, %s159
      %s177 = sphi 0, %s177
      %s179 = sphi 0, %s177
      %s180 = sphi 0, %s179
      %s194 = sphi 0, %s180
      %s200 = sphi 0, %s202
      %s203 = sphi 0, %s200
      %s204 = sphi 0, %s203
      %s220 = sphi 0, %s204
    $region4: #{tpu_custom_call.1} parent=1 // loop_header_branch
      %20 = sbr.rel (%p18) target = $region8
    $region5: #{tpu_custom_call.1} parent=1 // loop_body
      %s22 = ssub.s32 %s17, 1
      %s23 = ssub.s32 %s17, 2
      %s24 = sadd.s32 %s17, 1
      %s25 = ssub.s32 %s17, %s24
      %p26 = scmp.eq.s32.totalorder %s25, 0
      %s28 = sadd.s32 %s27, 1
      %s29 = scalar_select %p26, %s27, %s28
      %p32 = pneg %p26
      %p33 = scmp.eq.s32.totalorder %s17, 1
      %p34 = por %p32, %p33
      %p35 = scmp.ne.s32.totalorder %s27, %s30
      %p36 = scmp.eq.s32.totalorder %s17, 0
      %p37 = por %p35, %p36
      %p38 = scmp.ne.s32.totalorder %s27, %s30
      %p39 = scmp.eq.s32.totalorder %s22, 1
      %p40 = por %p38, %p39
      %p41 = scmp.ne.s32.totalorder %s30, %s31
      %p42 = scmp.eq.s32.totalorder %s22, 0
      %p43 = por %p41, %p42
      %p44 = scmp.ne.s32.totalorder %s30, %s31
      %p45 = scmp.eq.s32.totalorder %s23, 1
      %p46 = por %p44, %p45
      %p48 = scmp.ne.s32.totalorder %s31, %s47
      %p49 = scmp.eq.s32.totalorder %s23, 0
      %p50 = por %p48, %p49
      %s52 = sadd.s32 %s51, 1
      %p55 = scmp.eq.s32.totalorder %s17, 1
      %p56 = scmp.ne.s32.totalorder %s51, %s53
      %p57 = scmp.eq.s32.totalorder %s17, 0
      %p58 = por %p56, %p57
      %p59 = scmp.ne.s32.totalorder %s51, %s53
      %p60 = scmp.eq.s32.totalorder %s22, 1
      %p61 = por %p59, %p60
      %p62 = scmp.ne.s32.totalorder %s53, %s54
      %p63 = scmp.eq.s32.totalorder %s22, 0
      %p64 = por %p62, %p63
      %p65 = scmp.ne.s32.totalorder %s53, %s54
      %p66 = scmp.eq.s32.totalorder %s23, 1
      %p67 = por %p65, %p66
      %p69 = scmp.ne.s32.totalorder %s54, %s68
      %p70 = scmp.eq.s32.totalorder %s23, 0
      %p71 = por %p69, %p70
      %s73 = sadd.s32 %s72, 1
      %p76 = scmp.eq.s32.totalorder %s17, 1
      %p77 = scmp.ne.s32.totalorder %s72, %s74
      %p78 = scmp.eq.s32.totalorder %s17, 0
      %p79 = por %p77, %p78
      %p80 = scmp.ne.s32.totalorder %s72, %s74
      %p81 = scmp.eq.s32.totalorder %s22, 1
      %p82 = por %p80, %p81
      %p83 = scmp.ne.s32.totalorder %s74, %s75
      %p84 = scmp.eq.s32.totalorder %s22, 0
      %p85 = por %p83, %p84
      %p86 = scmp.ne.s32.totalorder %s74, %s75
      %p87 = scmp.eq.s32.totalorder %s23, 1
      %p88 = por %p86, %p87
      %p90 = scmp.ne.s32.totalorder %s75, %s89
      %p91 = scmp.eq.s32.totalorder %s23, 0
      %p92 = por %p90, %p91
      %s94 = sadd.s32 %s93, 1
      %p97 = scmp.eq.s32.totalorder %s17, 1
      %p98 = scmp.ne.s32.totalorder %s93, %s95
      %p99 = scmp.eq.s32.totalorder %s17, 0
      %p100 = por %p98, %p99
      %p101 = scmp.ne.s32.totalorder %s93, %s95
      %p102 = scmp.eq.s32.totalorder %s22, 1
      %p103 = por %p101, %p102
      %p104 = scmp.ne.s32.totalorder %s95, %s96
      %p105 = scmp.eq.s32.totalorder %s22, 0
      %p106 = por %p104, %p105
      %p107 = scmp.ne.s32.totalorder %s95, %s96
      %p108 = scmp.eq.s32.totalorder %s23, 1
      %p109 = por %p107, %p108
      %p111 = scmp.ne.s32.totalorder %s96, %s110
      %p112 = scmp.eq.s32.totalorder %s23, 0
      %p113 = por %p111, %p112
      %s115 = sadd.s32 %s114, 1
      %p118 = scmp.eq.s32.totalorder %s17, 1
      %p119 = scmp.ne.s32.totalorder %s114, %s116
      %p120 = scmp.eq.s32.totalorder %s17, 0
      %p121 = por %p119, %p120
      %p122 = scmp.ne.s32.totalorder %s114, %s116
      %p123 = scmp.eq.s32.totalorder %s22, 1
      %p124 = por %p122, %p123
      %p125 = scmp.ne.s32.totalorder %s116, %s117
      %p126 = scmp.eq.s32.totalorder %s22, 0
      %p127 = por %p125, %p126
      %p128 = scmp.ne.s32.totalorder %s116, %s117
      %p129 = scmp.eq.s32.totalorder %s23, 1
      %p130 = por %p128, %p129
      %p132 = scmp.ne.s32.totalorder %s117, %s131
      %p133 = scmp.eq.s32.totalorder %s23, 0
      %p134 = por %p132, %p133
      %s136 = sadd.s32 %s135, 1
      %p139 = scmp.eq.s32.totalorder %s17, 1
      %p140 = scmp.ne.s32.totalorder %s135, %s137
      %p141 = scmp.eq.s32.totalorder %s17, 0
      %p142 = por %p140, %p141
      %p143 = scmp.ne.s32.totalorder %s135, %s137
      %p144 = scmp.eq.s32.totalorder %s22, 1
      %p145 = por %p143, %p144
      %p146 = scmp.ne.s32.totalorder %s137, %s138
      %p147 = scmp.eq.s32.totalorder %s22, 0
      %p148 = por %p146, %p147
      %p149 = scmp.ne.s32.totalorder %s137, %s138
      %p150 = scmp.eq.s32.totalorder %s23, 1
      %p151 = por %p149, %p150
      %p153 = scmp.ne.s32.totalorder %s138, %s152
      %p154 = scmp.eq.s32.totalorder %s23, 0
      %p155 = por %p153, %p154
      %s157 = sadd.s32 %s156, 1
      %p160 = scmp.eq.s32.totalorder %s17, 1
      %p161 = scmp.ne.s32.totalorder %s156, %s158
      %p162 = scmp.eq.s32.totalorder %s17, 0
      %p163 = por %p161, %p162
      %p164 = scmp.ne.s32.totalorder %s156, %s158
      %p165 = scmp.eq.s32.totalorder %s22, 1
      %p166 = por %p164, %p165
      %p167 = scmp.ne.s32.totalorder %s158, %s159
      %p168 = scmp.eq.s32.totalorder %s22, 0
      %p169 = por %p167, %p168
      %p170 = scmp.ne.s32.totalorder %s158, %s159
      %p171 = scmp.eq.s32.totalorder %s23, 1
      %p172 = por %p170, %p171
      %p174 = scmp.ne.s32.totalorder %s159, %s173
      %p175 = scmp.eq.s32.totalorder %s23, 0
      %p176 = por %p174, %p175
      %s178 = sadd.s32 %s177, 1
      %p181 = scmp.eq.s32.totalorder %s17, 1
      %p182 = scmp.ne.s32.totalorder %s177, %s179
      %p183 = scmp.eq.s32.totalorder %s17, 0
      %p184 = por %p182, %p183
      %p185 = scmp.ne.s32.totalorder %s177, %s179
      %p186 = scmp.eq.s32.totalorder %s22, 1
      %p187 = por %p185, %p186
      %p188 = scmp.ne.s32.totalorder %s179, %s180
      %p189 = scmp.eq.s32.totalorder %s22, 0
      %p190 = por %p188, %p189
      %p191 = scmp.ne.s32.totalorder %s179, %s180
      %p192 = scmp.eq.s32.totalorder %s23, 1
      %p193 = por %p191, %p192
      %p195 = scmp.ne.s32.totalorder %s180, %s194
      %p196 = scmp.eq.s32.totalorder %s23, 0
      %p197 = por %p195, %p196
      %s198 = ssub.s32 %s17, %s24
      %p199 = scmp.eq.s32.totalorder %s198, 0
      %s201 = sadd.s32 %s200, 1
      %s202 = scalar_select %p199, %s200, %s201
      %p205 = pneg %p199
      %p206 = scmp.eq.s32.totalorder %s17, 1
      %p207 = por %p205, %p206
      %p208 = scmp.ne.s32.totalorder %s200, %s203
      %p209 = scmp.eq.s32.totalorder %s17, 0
      %p210 = por %p208, %p209
      %p211 = scmp.ne.s32.totalorder %s200, %s203
      %p212 = scmp.eq.s32.totalorder %s22, 1
      %p213 = por %p211, %p212
      %p214 = scmp.ne.s32.totalorder %s203, %s204
      %p215 = scmp.eq.s32.totalorder %s22, 0
      %p216 = por %p214, %p215
      %p217 = scmp.ne.s32.totalorder %s203, %s204
      %p218 = scmp.eq.s32.totalorder %s23, 1
      %p219 = por %p217, %p218
      %p221 = scmp.ne.s32.totalorder %s204, %s220
      %p222 = scmp.eq.s32.totalorder %s23, 0
      %p223 = por %p221, %p222
      %p224 = scmp.le.s32.totalorder 1, %s17
      %p225 = scmp.lt.s32.totalorder %s17, 3
      %p226 = pnand %p224, %p225
      %p227 = pneg %p226
      // Predicated region
      $region9: #{tpu_custom_call.1} parent=5 // pred_check
        _
      $region10: #{tpu_custom_call.1} parent=5 // pred_check_branch
        %229 = sbr.rel (%p226) target = $region12
      $region11: #{tpu_custom_call.1} parent=5 // pred_region
        %s230 = ssub.s32 %s17, 1
        // Predicated region
        $region13: #{tpu_custom_call.1} parent=11 // pred_check
          %p231 = pneg %p64
        $region14: #{tpu_custom_call.1} parent=11 // pred_check_branch
          %233 = sbr.rel (%p231) target = $region16
        $region15: #{tpu_custom_call.1} parent=11 // pred_region
          _
        $region16: #{tpu_custom_call.1} parent=11 // pred_fallthru
          _
        // Predicated region
        $region17: #{tpu_custom_call.1} parent=11 // pred_check
          %p234 = pneg %p85
        $region18: #{tpu_custom_call.1} parent=11 // pred_check_branch
          %236 = sbr.rel (%p234) target = $region20
        $region19: #{tpu_custom_call.1} parent=11 // pred_region
          _
        $region20: #{tpu_custom_call.1} parent=11 // pred_fallthru
          _
        // Predicated region
        $region21: #{tpu_custom_call.1} parent=11 // pred_check
          %p237 = pneg %p106
        $region22: #{tpu_custom_call.1} parent=11 // pred_check_branch
          %239 = sbr.rel (%p237) target = $region24
        $region23: #{tpu_custom_call.1} parent=11 // pred_region
          _
        $region24: #{tpu_custom_call.1} parent=11 // pred_fallthru
          _
        // Predicated region
        $region25: #{tpu_custom_call.1} parent=11 // pred_check
          %p240 = pneg %p127
        $region26: #{tpu_custom_call.1} parent=11 // pred_check_branch
          %242 = sbr.rel (%p240) target = $region28
        $region27: #{tpu_custom_call.1} parent=11 // pred_region
          _
        $region28: #{tpu_custom_call.1} parent=11 // pred_fallthru
          _
        // Predicated region
        $region29: #{tpu_custom_call.1} parent=11 // pred_check
          %p243 = pneg %p148
        $region30: #{tpu_custom_call.1} parent=11 // pred_check_branch
          %245 = sbr.rel (%p243) target = $region32
        $region31: #{tpu_custom_call.1} parent=11 // pred_region
          _
        $region32: #{tpu_custom_call.1} parent=11 // pred_fallthru
          _
        // Predicated region
        $region33: #{tpu_custom_call.1} parent=11 // pred_check
          %p246 = pneg %p169
        $region34: #{tpu_custom_call.1} parent=11 // pred_check_branch
          %248 = sbr.rel (%p246) target = $region36
        $region35: #{tpu_custom_call.1} parent=11 // pred_region
          _
        $region36: #{tpu_custom_call.1} parent=11 // pred_fallthru
          _
        // Predicated region
        $region37: #{tpu_custom_call.1} parent=11 // pred_check
          %p249 = pneg %p190
        $region38: #{tpu_custom_call.1} parent=11 // pred_check_branch
          %251 = sbr.rel (%p249) target = $region40
        $region39: #{tpu_custom_call.1} parent=11 // pred_region
          _
        $region40: #{tpu_custom_call.1} parent=11 // pred_fallthru
          _
      $region12: #{tpu_custom_call.1} parent=5 // pred_fallthru
        _
      %p252 = scmp.lt.s32.totalorder %s17, 2
      // Predicated region
      $region41: #{tpu_custom_call.1} parent=5 // pred_check
        %p253 = pneg %p252
      $region42: #{tpu_custom_call.1} parent=5 // pred_check_branch
        %255 = sbr.rel (%p253) target = $region44
      $region43: #{tpu_custom_call.1} parent=5 // pred_region
        // Predicated region
        $region45: #{tpu_custom_call.1} parent=43 // pred_check
          %p256 = pneg %p37
        $region46: #{tpu_custom_call.1} parent=43 // pred_check_branch
          %258 = sbr.rel (%p256) target = $region48
        $region47: #{tpu_custom_call.1} parent=43 // pred_region
          %p259 = scmp.lt.s32.totalorder %s17, 1
          %s260 = scalar_select %p259, %s17, 1
          %s261 = smul.addr %s260, 2
          %s262 = smul.addr %s261, 4
          %s263 = scalar_lea.vmem %s0, %s262
        $region48: #{tpu_custom_call.1} parent=43 // pred_fallthru
          _
      $region44: #{tpu_custom_call.1} parent=5 // pred_fallthru
        _
      %p264 = scmp.le.s32.totalorder 1, %s17
      %p265 = scmp.lt.s32.totalorder %s17, 3
      %p266 = pnand %p264, %p265
      %p267 = pneg %p266
      // Predicated region
      $region49: #{tpu_custom_call.1} parent=5 // pred_check
        _
      $region50: #{tpu_custom_call.1} parent=5 // pred_check_branch
        %269 = sbr.rel (%p266) target = $region52
      $region51: #{tpu_custom_call.1} parent=5 // pred_region
        %s270 = ssub.s32 %s17, 1
        %p271 = scmp.lt.s32.totalorder %s22, 1
        %s272 = scalar_select %p271, %s22, 1
        %s273 = smul.addr %s272, 2
        %s274 = smul.addr %s273, 4
        %s275 = scalar_lea.vmem %s0, %s274
        %p276 = pneg %p43
        %p277 = pneg %p40
        %p278 = pneg %p64
        %p279 = pneg %p61
        %p280 = pneg %p85
        %p281 = pneg %p82
        %p282 = pneg %p106
        %p283 = pneg %p103
        %p284 = pneg %p127
        %p285 = pneg %p124
        %p286 = pneg %p148
        %p287 = pneg %p145
        %p288 = pneg %p169
        %p289 = pneg %p166
        %p290 = pneg %p190
        %p291 = pneg %p187
        %p292 = pneg %p216
        %p293 = pneg %p213
        %s294 = sand.u32 %s203, 1
        %s295 = scalar_lea.sflag [#allocation3], %s294
        %s296 = sand.u32 %s203, 1
        %s297 = smul.addr %s296, 16
        %s298 = scalar_lea.vmem [#allocation2], %s297
        %p299 = scmp.lt.s32.totalorder %s22, 1
        %s300 = scalar_select %p299, %s22, 1
        %s301 = smul.addr %s300, 2
        %s302 = smul.addr %s301, 4
        %s303 = scalar_lea.vmem %s0, %s302
        %v305 = vld [vmem:[%s303] sm:$0xff]
        %v306 = vld [vmem:[%s1] ss:$2 sm:$0x3]
        %s307 = scalar_lea.vmem %s1, 1
        %v308 = vld [vmem:[%s307] ss:$2 sm:$0x3]
        %vm309 = vcmp.eq.s32.totalorder %v306, 0
        %vm310 = vcmp.eq.s32.totalorder %v306, 15
        %vm311 = vcmp.eq.s32.totalorder %v308, 0
        %vm312 = vcmp.eq.s32.totalorder %v308, 15
        %v314 = vcombine.high %v305, %v305
        %316 = vrot.lane.b32.xlu0 %v305, 1
        %v317 = vpop.permute.xlu0 %316
        %318 = vrot.lane.b32.xlu0 %v314, 1
        %v319 = vpop.permute.xlu0 %318
        %v320 = vlaneseq
        %v321 = vand.u32 %v320, 127
        %vm322 = vcmp.lt.s32.totalorder %v321, 1
        %v323 = vsel %vm322, %v317, %v319
        %v324 = vsel %vm322, %v319, %v317
        %325 = vrot.lane.b32.xlu0 %v305, 127
        %v326 = vpop.permute.xlu0 %325
        %327 = vrot.lane.b32.xlu0 %v314, 127
        %v328 = vpop.permute.xlu0 %327
        %vm329 = vcmp.lt.s32.totalorder %v321, 127
        %v330 = vsel %vm329, %v326, %v328
        %v331 = vsel %vm329, %v328, %v326
        %v332 = vsel %vm309, 1, 0
        %v333 = vlaneseq
        %v334 = vshrl.u32 %v333, 7
        %v335 = vsub.s32 0, %v334
        %v336 = vrot.slane %v332, %v335
        %v337 = vlaneseq
        %v338 = vshrl.u32 %v337, 7
        %v339 = vsub.s32 1, %v338
        %v340 = vrot.slane %v332, %v339
        %vm341 = vcmp.eq.s32.totalorder %v336, 1
        %vm342 = vcmp.eq.s32.totalorder %v340, 1
        %v343 = vsel %vm341, %v330, %v324
        %v344 = vsel %vm342, %v331, %v323
        %v345 = vsel %vm310, 1, 0
        %v346 = vlaneseq
        %v347 = vshrl.u32 %v346, 7
        %v348 = vsub.s32 0, %v347
        %v349 = vrot.slane %v345, %v348
        %v350 = vlaneseq
        %v351 = vshrl.u32 %v350, 7
        %v352 = vsub.s32 1, %v351
        %v353 = vrot.slane %v345, %v352
        %vm354 = vcmp.eq.s32.totalorder %v349, 1
        %vm355 = vcmp.eq.s32.totalorder %v353, 1
        %v356 = vsel %vm354, %v324, %v330
        %v357 = vsel %vm355, %v323, %v331
        %358 = vrot.lane.b32.xlu0 %v343, 16
        %v359 = vpop.permute.xlu0 %358
        %360 = vrot.lane.b32.xlu0 %v344, 16
        %v361 = vpop.permute.xlu0 %360
        %vm362 = vcmp.lt.s32.totalorder %v321, 16
        %v363 = vsel %vm362, %v359, %v361
        %v364 = vsel %vm362, %v361, %v359
        %365 = vrot.lane.b32.xlu0 %v343, 112
        %v366 = vpop.permute.xlu0 %365
        %367 = vrot.lane.b32.xlu0 %v344, 112
        %v368 = vpop.permute.xlu0 %367
        %vm369 = vcmp.lt.s32.totalorder %v321, 112
        %v370 = vsel %vm369, %v366, %v368
        %v371 = vsel %vm369, %v368, %v366
        %v372 = vsel %vm311, 1, 0
        %v373 = vlaneseq
        %v374 = vshrl.u32 %v373, 7
        %v375 = vsub.s32 0, %v374
        %v376 = vrot.slane %v372, %v375
        %v377 = vlaneseq
        %v378 = vshrl.u32 %v377, 7
        %v379 = vsub.s32 1, %v378
        %v380 = vrot.slane %v372, %v379
        %vm381 = vcmp.eq.s32.totalorder %v376, 1
        %vm382 = vcmp.eq.s32.totalorder %v380, 1
        %v383 = vsel %vm381, %v370, %v364
        %v384 = vsel %vm382, %v371, %v363
        %v385 = vsel %vm312, 1, 0
        %v386 = vlaneseq
        %v387 = vshrl.u32 %v386, 7
        %v388 = vsub.s32 0, %v387
        %v389 = vrot.slane %v385, %v388
        %v390 = vlaneseq
        %v391 = vshrl.u32 %v390, 7
        %v392 = vsub.s32 1, %v391
        %v393 = vrot.slane %v385, %v392
        %vm394 = vcmp.eq.s32.totalorder %v389, 1
        %vm395 = vcmp.eq.s32.totalorder %v393, 1
        %v396 = vsel %vm394, %v364, %v370
        %v397 = vsel %vm395, %v363, %v371
        %398 = vrot.lane.b32.xlu0 %v305, 16
        %v399 = vpop.permute.xlu0 %398
        %400 = vrot.lane.b32.xlu0 %v314, 16
        %v401 = vpop.permute.xlu0 %400
        %v402 = vsel %vm362, %v399, %v401
        %v403 = vsel %vm362, %v401, %v399
        %404 = vrot.lane.b32.xlu0 %v305, 112
        %v405 = vpop.permute.xlu0 %404
        %406 = vrot.lane.b32.xlu0 %v314, 112
        %v407 = vpop.permute.xlu0 %406
        %v408 = vsel %vm369, %v405, %v407
        %v409 = vsel %vm369, %v407, %v405
        %v410 = vsel %vm381, %v408, %v403
        %v411 = vsel %vm382, %v409, %v402
        %v412 = vsel %vm394, %v403, %v408
        %v413 = vsel %vm395, %v402, %v409
        %414 = vrot.lane.b32.xlu0 %v356, 16
        %v415 = vpop.permute.xlu0 %414
        %416 = vrot.lane.b32.xlu0 %v357, 16
        %v417 = vpop.permute.xlu0 %416
        %v418 = vsel %vm362, %v415, %v417
        %v419 = vsel %vm362, %v417, %v415
        %420 = vrot.lane.b32.xlu0 %v356, 112
        %v421 = vpop.permute.xlu0 %420
        %422 = vrot.lane.b32.xlu0 %v357, 112
        %v423 = vpop.permute.xlu0 %422
        %v424 = vsel %vm369, %v421, %v423
        %v425 = vsel %vm369, %v423, %v421
        %v426 = vsel %vm381, %v424, %v419
        %v427 = vsel %vm382, %v425, %v418
        %v428 = vsel %vm394, %v419, %v424
        %v429 = vsel %vm395, %v418, %v425
        %v430 = vld [vmem:[%s2] sm:$0xf]
        %v431 = vpack.c.bf16 %v383, %v383
        %v432 = vpack.c.bf16 %v384, %v384
        %s433 = scalar_lea.vmem %s2, 4
        %v434 = vld [vmem:[%s433] sm:$0xf]
        %v435 = vpack.c.bf16 %v410, %v410
        %v436 = vpack.c.bf16 %v411, %v411
        %vm437 = vcmask 31744
        %v439 = vsel %vm437, %v434, 0
        %vm441 = vcmask 1041408
        %v443 = vsel %vm441, %v435, 0
        %v446 = vsel %vm441, %v436, 0
        %448 = vmatprep.subr.bf16.mxu0 %v446
        %449 = vmatpush1.bf16.msra.mxu0 %v443
        %450 = vmatprep.subr.bf16.mxu0 0
        %451 = vmatpush1.bf16.msra.mxu0 0
        %452 = vmatprep.subr.bf16.mxu0 0
        %453 = vmatpush1.bf16.msra.mxu0 0
        %454 = vmatprep.subr.bf16.mxu0 0
        %455 = vmatpush1.bf16.msra.mxu0 0
        %456 = vmatprep.subr.bf16.mxu0 0
        %457 = vmatpush1.bf16.msra.mxu0 0
        %458 = vmatprep.subr.bf16.mxu0 0
        %459 = vmatpush1.bf16.msra.mxu0 0
        %460 = vmatprep.subr.bf16.mxu0 0
        %461 = vmatpush1.bf16.msra.mxu0 0
        %462 = vmatprep.subr.bf16.mxu0 0
        %463 = vmatpush1.bf16.msra.mxu0 0
        %464 = vmatprep.subr.bf16.mxu0 0
        %465 = vmatpush1.bf16.msra.mxu0 0
        %466 = vmatprep.subr.bf16.mxu0 0
        %467 = vmatpush1.bf16.msra.mxu0 0
        %468 = vmatprep.subr.bf16.mxu0 0
        %469 = vmatpush1.bf16.msra.mxu0 0
        %470 = vmatprep.subr.bf16.mxu0 0
        %471 = vmatpush1.bf16.msra.mxu0 0
        %472 = vmatprep.subr.bf16.mxu0 0
        %473 = vmatpush1.bf16.msra.mxu0 0
        %474 = vmatprep.subr.bf16.mxu0 0
        %475 = vmatpush1.bf16.msra.mxu0 0
        %476 = vmatprep.subr.bf16.mxu0 0
        %477 = vmatpush1.bf16.msra.mxu0 0
        %478 = vmatprep.subr.bf16.mxu0 0
        %479 = vmatpush1.bf16.msra.mxu0 0
        %480 = vmatprep.mubr.bf16.mxu0 0
        %481 = vmatmul.mubr.bf16.gmra.mrb[0].mxu0 %v439
        %v482 = vpop.f32.mrb[0].mxu0
        %v483 = vadd.f32 0.0, %v482
        %v484 = vpop.f32.mrb[0].mxu0
        %v485 = vadd.f32 0.0, %v484
        %v486 = vpop.f32.mrb[0].mxu0
        %v487 = vpop.f32.mrb[0].mxu0
        %488 = vdwg.mxu0
        %v490 = vsel %vm437, %v430, 0
        %v493 = vsel %vm441, %v431, 0
        %v496 = vsel %vm441, %v432, 0
        %498 = vmatprep.subr.bf16.mxu0 %v496
        %499 = vmatpush1.bf16.msra.mxu0 %v493
        %500 = vmatprep.subr.bf16.mxu0 0
        %501 = vmatpush1.bf16.msra.mxu0 0
        %502 = vmatprep.subr.bf16.mxu0 0
        %503 = vmatpush1.bf16.msra.mxu0 0
        %504 = vmatprep.subr.bf16.mxu0 0
        %505 = vmatpush1.bf16.msra.mxu0 0
        %506 = vmatprep.subr.bf16.mxu0 0
        %507 = vmatpush1.bf16.msra.mxu0 0
        %508 = vmatprep.subr.bf16.mxu0 0
        %509 = vmatpush1.bf16.msra.mxu0 0
        %510 = vmatprep.subr.bf16.mxu0 0
        %511 = vmatpush1.bf16.msra.mxu0 0
        %512 = vmatprep.subr.bf16.mxu0 0
        %513 = vmatpush1.bf16.msra.mxu0 0
        %514 = vmatprep.subr.bf16.mxu0 0
        %515 = vmatpush1.bf16.msra.mxu0 0
        %516 = vmatprep.subr.bf16.mxu0 0
        %517 = vmatpush1.bf16.msra.mxu0 0
        %518 = vmatprep.subr.bf16.mxu0 0
        %519 = vmatpush1.bf16.msra.mxu0 0
        %520 = vmatprep.subr.bf16.mxu0 0
        %521 = vmatpush1.bf16.msra.mxu0 0
        %522 = vmatprep.subr.bf16.mxu0 0
        %523 = vmatpush1.bf16.msra.mxu0 0
        %524 = vmatprep.subr.bf16.mxu0 0
        %525 = vmatpush1.bf16.msra.mxu0 0
        %526 = vmatprep.subr.bf16.mxu0 0
        %527 = vmatpush1.bf16.msra.mxu0 0
        %528 = vmatprep.subr.bf16.mxu0 0
        %529 = vmatpush1.bf16.msra.mxu0 0
        %530 = vmatprep.mubr.bf16.mxu0 0
        %531 = vmatmul.mubr.bf16.gmra.mrb[0].mxu0 %v490
        %v532 = vpop.f32.mrb[0].mxu0
        %v533 = vadd.f32 %v483, %v532
        %v534 = vpop.f32.mrb[0].mxu0
        %v535 = vadd.f32 %v485, %v534
        %v536 = vpop.f32.mrb[0].mxu0
        %v537 = vpop.f32.mrb[0].mxu0
        %538 = vdwg.mxu0
        %s539 = scalar_lea.vmem %s2, 8
        %v540 = vld [vmem:[%s539] sm:$0xf]
        %v541 = vpack.c.bf16 %v426, %v426
        %v542 = vpack.c.bf16 %v427, %v427
        %v544 = vsel %vm437, %v540, 0
        %v547 = vsel %vm441, %v541, 0
        %v550 = vsel %vm441, %v542, 0
        %552 = vmatprep.subr.bf16.mxu0 %v550
        %553 = vmatpush1.bf16.msra.mxu0 %v547
        %554 = vmatprep.subr.bf16.mxu0 0
        %555 = vmatpush1.bf16.msra.mxu0 0
        %556 = vmatprep.subr.bf16.mxu0 0
        %557 = vmatpush1.bf16.msra.mxu0 0
        %558 = vmatprep.subr.bf16.mxu0 0
        %559 = vmatpush1.bf16.msra.mxu0 0
        %560 = vmatprep.subr.bf16.mxu0 0
        %561 = vmatpush1.bf16.msra.mxu0 0
        %562 = vmatprep.subr.bf16.mxu0 0
        %563 = vmatpush1.bf16.msra.mxu0 0
        %564 = vmatprep.subr.bf16.mxu0 0
        %565 = vmatpush1.bf16.msra.mxu0 0
        %566 = vmatprep.subr.bf16.mxu0 0
        %567 = vmatpush1.bf16.msra.mxu0 0
        %568 = vmatprep.subr.bf16.mxu0 0
        %569 = vmatpush1.bf16.msra.mxu0 0
        %570 = vmatprep.subr.bf16.mxu0 0
        %571 = vmatpush1.bf16.msra.mxu0 0
        %572 = vmatprep.subr.bf16.mxu0 0
        %573 = vmatpush1.bf16.msra.mxu0 0
        %574 = vmatprep.subr.bf16.mxu0 0
        %575 = vmatpush1.bf16.msra.mxu0 0
        %576 = vmatprep.subr.bf16.mxu0 0
        %577 = vmatpush1.bf16.msra.mxu0 0
        %578 = vmatprep.subr.bf16.mxu0 0
        %579 = vmatpush1.bf16.msra.mxu0 0
        %580 = vmatprep.subr.bf16.mxu0 0
        %581 = vmatpush1.bf16.msra.mxu0 0
        %582 = vmatprep.subr.bf16.mxu0 0
        %583 = vmatpush1.bf16.msra.mxu0 0
        %584 = vmatprep.mubr.bf16.mxu0 0
        %585 = vmatmul.mubr.bf16.gmra.mrb[0].mxu0 %v544
        %v586 = vpop.f32.mrb[0].mxu0
        %v587 = vadd.f32 0.0, %v586
        %v588 = vpop.f32.mrb[0].mxu0
        %v589 = vadd.f32 0.0, %v588
        %v590 = vpop.f32.mrb[0].mxu0
        %v591 = vpop.f32.mrb[0].mxu0
        %592 = vdwg.mxu0
        %v593 = vadd.f32 %v533, %v587
        %v594 = vadd.f32 %v535, %v589
        %s595 = scalar_lea.vmem %s2, 12
        %v596 = vld [vmem:[%s595] sm:$0xf]
        %v597 = vpack.c.bf16 %v343, %v343
        %v598 = vpack.c.bf16 %v344, %v344
        %v600 = vsel %vm437, %v596, 0
        %v603 = vsel %vm441, %v597, 0
        %v606 = vsel %vm441, %v598, 0
        %608 = vmatprep.subr.bf16.mxu0 %v606
        %609 = vmatpush1.bf16.msra.mxu0 %v603
        %610 = vmatprep.subr.bf16.mxu0 0
        %611 = vmatpush1.bf16.msra.mxu0 0
        %612 = vmatprep.subr.bf16.mxu0 0
        %613 = vmatpush1.bf16.msra.mxu0 0
        %614 = vmatprep.subr.bf16.mxu0 0
        %615 = vmatpush1.bf16.msra.mxu0 0
        %616 = vmatprep.subr.bf16.mxu0 0
        %617 = vmatpush1.bf16.msra.mxu0 0
        %618 = vmatprep.subr.bf16.mxu0 0
        %619 = vmatpush1.bf16.msra.mxu0 0
        %620 = vmatprep.subr.bf16.mxu0 0
        %621 = vmatpush1.bf16.msra.mxu0 0
        %622 = vmatprep.subr.bf16.mxu0 0
        %623 = vmatpush1.bf16.msra.mxu0 0
        %624 = vmatprep.subr.bf16.mxu0 0
        %625 = vmatpush1.bf16.msra.mxu0 0
        %626 = vmatprep.subr.bf16.mxu0 0
        %627 = vmatpush1.bf16.msra.mxu0 0
        %628 = vmatprep.subr.bf16.mxu0 0
        %629 = vmatpush1.bf16.msra.mxu0 0
        %630 = vmatprep.subr.bf16.mxu0 0
        %631 = vmatpush1.bf16.msra.mxu0 0
        %632 = vmatprep.subr.bf16.mxu0 0
        %633 = vmatpush1.bf16.msra.mxu0 0
        %634 = vmatprep.subr.bf16.mxu0 0
        %635 = vmatpush1.bf16.msra.mxu0 0
        %636 = vmatprep.subr.bf16.mxu0 0
        %637 = vmatpush1.bf16.msra.mxu0 0
        %638 = vmatprep.subr.bf16.mxu0 0
        %639 = vmatpush1.bf16.msra.mxu0 0
        %640 = vmatprep.mubr.bf16.mxu0 0
        %641 = vmatmul.mubr.bf16.gmra.mrb[0].mxu0 %v600
        %v642 = vpop.f32.mrb[0].mxu0
        %v643 = vadd.f32 0.0, %v642
        %v644 = vpop.f32.mrb[0].mxu0
        %v645 = vadd.f32 0.0, %v644
        %v646 = vpop.f32.mrb[0].mxu0
        %v647 = vpop.f32.mrb[0].mxu0
        %648 = vdwg.mxu0
        %v649 = vadd.f32 %v593, %v643
        %v650 = vadd.f32 %v594, %v645
        %s651 = scalar_lea.vmem %s2, 16
        %v652 = vld [vmem:[%s651] sm:$0xf]
        %v653 = vpack.c.bf16 %v305, %v305
        %v654 = vpack.c.bf16 %v314, %v314
        %v656 = vsel %vm437, %v652, 0
        %v659 = vsel %vm441, %v653, 0
        %v662 = vsel %vm441, %v654, 0
        %664 = vmatprep.subr.bf16.mxu0 %v662
        %665 = vmatpush1.bf16.msra.mxu0 %v659
        %666 = vmatprep.subr.bf16.mxu0 0
        %667 = vmatpush1.bf16.msra.mxu0 0
        %668 = vmatprep.subr.bf16.mxu0 0
        %669 = vmatpush1.bf16.msra.mxu0 0
        %670 = vmatprep.subr.bf16.mxu0 0
        %671 = vmatpush1.bf16.msra.mxu0 0
        %672 = vmatprep.subr.bf16.mxu0 0
        %673 = vmatpush1.bf16.msra.mxu0 0
        %674 = vmatprep.subr.bf16.mxu0 0
        %675 = vmatpush1.bf16.msra.mxu0 0
        %676 = vmatprep.subr.bf16.mxu0 0
        %677 = vmatpush1.bf16.msra.mxu0 0
        %678 = vmatprep.subr.bf16.mxu0 0
        %679 = vmatpush1.bf16.msra.mxu0 0
        %680 = vmatprep.subr.bf16.mxu0 0
        %681 = vmatpush1.bf16.msra.mxu0 0
        %682 = vmatprep.subr.bf16.mxu0 0
        %683 = vmatpush1.bf16.msra.mxu0 0
        %684 = vmatprep.subr.bf16.mxu0 0
        %685 = vmatpush1.bf16.msra.mxu0 0
        %686 = vmatprep.subr.bf16.mxu0 0
        %687 = vmatpush1.bf16.msra.mxu0 0
        %688 = vmatprep.subr.bf16.mxu0 0
        %689 = vmatpush1.bf16.msra.mxu0 0
        %690 = vmatprep.subr.bf16.mxu0 0
        %691 = vmatpush1.bf16.msra.mxu0 0
        %692 = vmatprep.subr.bf16.mxu0 0
        %693 = vmatpush1.bf16.msra.mxu0 0
        %694 = vmatprep.subr.bf16.mxu0 0
        %695 = vmatpush1.bf16.msra.mxu0 0
        %696 = vmatprep.mubr.bf16.mxu0 0
        %697 = vmatmul.mubr.bf16.gmra.mrb[0].mxu0 %v656
        %v698 = vpop.f32.mrb[0].mxu0
        %v699 = vadd.f32 0.0, %v698
        %v700 = vpop.f32.mrb[0].mxu0
        %v701 = vadd.f32 0.0, %v700
        %v702 = vpop.f32.mrb[0].mxu0
        %v703 = vpop.f32.mrb[0].mxu0
        %704 = vdwg.mxu0
        %v705 = vadd.f32 %v649, %v699
        %v706 = vadd.f32 %v650, %v701
        %s707 = scalar_lea.vmem %s2, 20
        %v708 = vld [vmem:[%s707] sm:$0xf]
        %v709 = vpack.c.bf16 %v356, %v356
        %v710 = vpack.c.bf16 %v357, %v357
        %v712 = vsel %vm437, %v708, 0
        %v715 = vsel %vm441, %v709, 0
        %v718 = vsel %vm441, %v710, 0
        %720 = vmatprep.subr.bf16.mxu0 %v718
        %721 = vmatpush1.bf16.msra.mxu0 %v715
        %722 = vmatprep.subr.bf16.mxu0 0
        %723 = vmatpush1.bf16.msra.mxu0 0
        %724 = vmatprep.subr.bf16.mxu0 0
        %725 = vmatpush1.bf16.msra.mxu0 0
        %726 = vmatprep.subr.bf16.mxu0 0
        %727 = vmatpush1.bf16.msra.mxu0 0
        %728 = vmatprep.subr.bf16.mxu0 0
        %729 = vmatpush1.bf16.msra.mxu0 0
        %730 = vmatprep.subr.bf16.mxu0 0
        %731 = vmatpush1.bf16.msra.mxu0 0
        %732 = vmatprep.subr.bf16.mxu0 0
        %733 = vmatpush1.bf16.msra.mxu0 0
        %734 = vmatprep.subr.bf16.mxu0 0
        %735 = vmatpush1.bf16.msra.mxu0 0
        %736 = vmatprep.subr.bf16.mxu0 0
        %737 = vmatpush1.bf16.msra.mxu0 0
        %738 = vmatprep.subr.bf16.mxu0 0
        %739 = vmatpush1.bf16.msra.mxu0 0
        %740 = vmatprep.subr.bf16.mxu0 0
        %741 = vmatpush1.bf16.msra.mxu0 0
        %742 = vmatprep.subr.bf16.mxu0 0
        %743 = vmatpush1.bf16.msra.mxu0 0
        %744 = vmatprep.subr.bf16.mxu0 0
        %745 = vmatpush1.bf16.msra.mxu0 0
        %746 = vmatprep.subr.bf16.mxu0 0
        %747 = vmatpush1.bf16.msra.mxu0 0
        %748 = vmatprep.subr.bf16.mxu0 0
        %749 = vmatpush1.bf16.msra.mxu0 0
        %750 = vmatprep.subr.bf16.mxu0 0
        %751 = vmatpush1.bf16.msra.mxu0 0
        %752 = vmatprep.mubr.bf16.mxu0 0
        %753 = vmatmul.mubr.bf16.gmra.mrb[0].mxu0 %v712
        %v754 = vpop.f32.mrb[0].mxu0
        %v755 = vadd.f32 0.0, %v754
        %v756 = vpop.f32.mrb[0].mxu0
        %v757 = vadd.f32 0.0, %v756
        %v758 = vpop.f32.mrb[0].mxu0
        %v759 = vpop.f32.mrb[0].mxu0
        %760 = vdwg.mxu0
        %v761 = vadd.f32 %v705, %v755
        %v762 = vadd.f32 %v706, %v757
        %s763 = scalar_lea.vmem %s2, 24
        %v764 = vld [vmem:[%s763] sm:$0xf]
        %v765 = vpack.c.bf16 %v396, %v396
        %v766 = vpack.c.bf16 %v397, %v397
        %v768 = vsel %vm437, %v764, 0
        %v771 = vsel %vm441, %v765, 0
        %v774 = vsel %vm441, %v766, 0
        %776 = vmatprep.subr.bf16.mxu0 %v774
        %777 = vmatpush1.bf16.msra.mxu0 %v771
        %778 = vmatprep.subr.bf16.mxu0 0
        %779 = vmatpush1.bf16.msra.mxu0 0
        %780 = vmatprep.subr.bf16.mxu0 0
        %781 = vmatpush1.bf16.msra.mxu0 0
        %782 = vmatprep.subr.bf16.mxu0 0
        %783 = vmatpush1.bf16.msra.mxu0 0
        %784 = vmatprep.subr.bf16.mxu0 0
        %785 = vmatpush1.bf16.msra.mxu0 0
        %786 = vmatprep.subr.bf16.mxu0 0
        %787 = vmatpush1.bf16.msra.mxu0 0
        %788 = vmatprep.subr.bf16.mxu0 0
        %789 = vmatpush1.bf16.msra.mxu0 0
        %790 = vmatprep.subr.bf16.mxu0 0
        %791 = vmatpush1.bf16.msra.mxu0 0
        %792 = vmatprep.subr.bf16.mxu0 0
        %793 = vmatpush1.bf16.msra.mxu0 0
        %794 = vmatprep.subr.bf16.mxu0 0
        %795 = vmatpush1.bf16.msra.mxu0 0
        %796 = vmatprep.subr.bf16.mxu0 0
        %797 = vmatpush1.bf16.msra.mxu0 0
        %798 = vmatprep.subr.bf16.mxu0 0
        %799 = vmatpush1.bf16.msra.mxu0 0
        %800 = vmatprep.subr.bf16.mxu0 0
        %801 = vmatpush1.bf16.msra.mxu0 0
        %802 = vmatprep.subr.bf16.mxu0 0
        %803 = vmatpush1.bf16.msra.mxu0 0
        %804 = vmatprep.subr.bf16.mxu0 0
        %805 = vmatpush1.bf16.msra.mxu0 0
        %806 = vmatprep.subr.bf16.mxu0 0
        %807 = vmatpush1.bf16.msra.mxu0 0
        %808 = vmatprep.mubr.bf16.mxu0 0
        %809 = vmatmul.mubr.bf16.gmra.mrb[0].mxu0 %v768
        %v810 = vpop.f32.mrb[0].mxu0
        %v811 = vadd.f32 0.0, %v810
        %v812 = vpop.f32.mrb[0].mxu0
        %v813 = vadd.f32 0.0, %v812
        %v814 = vpop.f32.mrb[0].mxu0
        %v815 = vpop.f32.mrb[0].mxu0
        %816 = vdwg.mxu0
        %v817 = vadd.f32 %v761, %v811
        %v818 = vadd.f32 %v762, %v813
        %s819 = scalar_lea.vmem %s2, 28
        %v820 = vld [vmem:[%s819] sm:$0xf]
        %v821 = vpack.c.bf16 %v412, %v412
        %v822 = vpack.c.bf16 %v413, %v413
        %v824 = vsel %vm437, %v820, 0
        %v827 = vsel %vm441, %v821, 0
        %v830 = vsel %vm441, %v822, 0
        %832 = vmatprep.subr.bf16.mxu0 %v830
        %833 = vmatpush1.bf16.msra.mxu0 %v827
        %834 = vmatprep.subr.bf16.mxu0 0
        %835 = vmatpush1.bf16.msra.mxu0 0
        %836 = vmatprep.subr.bf16.mxu0 0
        %837 = vmatpush1.bf16.msra.mxu0 0
        %838 = vmatprep.subr.bf16.mxu0 0
        %839 = vmatpush1.bf16.msra.mxu0 0
        %840 = vmatprep.subr.bf16.mxu0 0
        %841 = vmatpush1.bf16.msra.mxu0 0
        %842 = vmatprep.subr.bf16.mxu0 0
        %843 = vmatpush1.bf16.msra.mxu0 0
        %844 = vmatprep.subr.bf16.mxu0 0
        %845 = vmatpush1.bf16.msra.mxu0 0
        %846 = vmatprep.subr.bf16.mxu0 0
        %847 = vmatpush1.bf16.msra.mxu0 0
        %848 = vmatprep.subr.bf16.mxu0 0
        %849 = vmatpush1.bf16.msra.mxu0 0
        %850 = vmatprep.subr.bf16.mxu0 0
        %851 = vmatpush1.bf16.msra.mxu0 0
        %852 = vmatprep.subr.bf16.mxu0 0
        %853 = vmatpush1.bf16.msra.mxu0 0
        %854 = vmatprep.subr.bf16.mxu0 0
        %855 = vmatpush1.bf16.msra.mxu0 0
        %856 = vmatprep.subr.bf16.mxu0 0
        %857 = vmatpush1.bf16.msra.mxu0 0
        %858 = vmatprep.subr.bf16.mxu0 0
        %859 = vmatpush1.bf16.msra.mxu0 0
        %860 = vmatprep.subr.bf16.mxu0 0
        %861 = vmatpush1.bf16.msra.mxu0 0
        %862 = vmatprep.subr.bf16.mxu0 0
        %863 = vmatpush1.bf16.msra.mxu0 0
        %864 = vmatprep.mubr.bf16.mxu0 0
        %865 = vmatmul.mubr.bf16.gmra.mrb[0].mxu0 %v824
        %v866 = vpop.f32.mrb[0].mxu0
        %v867 = vadd.f32 0.0, %v866
        %v868 = vpop.f32.mrb[0].mxu0
        %v869 = vadd.f32 0.0, %v868
        %v870 = vpop.f32.mrb[0].mxu0
        %v871 = vpop.f32.mrb[0].mxu0
        %872 = vdwg.mxu0
        %v873 = vadd.f32 %v817, %v867
        %v874 = vadd.f32 %v818, %v869
        %s875 = scalar_lea.vmem %s2, 32
        %v876 = vld [vmem:[%s875] sm:$0xf]
        %v877 = vpack.c.bf16 %v428, %v428
        %v878 = vpack.c.bf16 %v429, %v429
        %v880 = vsel %vm437, %v876, 0
        %v883 = vsel %vm441, %v877, 0
        %v886 = vsel %vm441, %v878, 0
        %888 = vmatprep.subr.bf16.mxu0 %v886
        %889 = vmatpush1.bf16.msra.mxu0 %v883
        %890 = vmatprep.subr.bf16.mxu0 0
        %891 = vmatpush1.bf16.msra.mxu0 0
        %892 = vmatprep.subr.bf16.mxu0 0
        %893 = vmatpush1.bf16.msra.mxu0 0
        %894 = vmatprep.subr.bf16.mxu0 0
        %895 = vmatpush1.bf16.msra.mxu0 0
        %896 = vmatprep.subr.bf16.mxu0 0
        %897 = vmatpush1.bf16.msra.mxu0 0
        %898 = vmatprep.subr.bf16.mxu0 0
        %899 = vmatpush1.bf16.msra.mxu0 0
        %900 = vmatprep.subr.bf16.mxu0 0
        %901 = vmatpush1.bf16.msra.mxu0 0
        %902 = vmatprep.subr.bf16.mxu0 0
        %903 = vmatpush1.bf16.msra.mxu0 0
        %904 = vmatprep.subr.bf16.mxu0 0
        %905 = vmatpush1.bf16.msra.mxu0 0
        %906 = vmatprep.subr.bf16.mxu0 0
        %907 = vmatpush1.bf16.msra.mxu0 0
        %908 = vmatprep.subr.bf16.mxu0 0
        %909 = vmatpush1.bf16.msra.mxu0 0
        %910 = vmatprep.subr.bf16.mxu0 0
        %911 = vmatpush1.bf16.msra.mxu0 0
        %912 = vmatprep.subr.bf16.mxu0 0
        %913 = vmatpush1.bf16.msra.mxu0 0
        %914 = vmatprep.subr.bf16.mxu0 0
        %915 = vmatpush1.bf16.msra.mxu0 0
        %916 = vmatprep.subr.bf16.mxu0 0
        %917 = vmatpush1.bf16.msra.mxu0 0
        %918 = vmatprep.subr.bf16.mxu0 0
        %919 = vmatpush1.bf16.msra.mxu0 0
        %920 = vmatprep.mubr.bf16.mxu0 0
        %921 = vmatmul.mubr.bf16.gmra.mrb[0].mxu0 %v880
        %v922 = vpop.f32.mrb[0].mxu0
        %v923 = vadd.f32 0.0, %v922
        %v924 = vpop.f32.mrb[0].mxu0
        %v925 = vadd.f32 0.0, %v924
        %v926 = vpop.f32.mrb[0].mxu0
        %v927 = vpop.f32.mrb[0].mxu0
        %928 = vdwg.mxu0
        %v929 = vadd.f32 %v873, %v923
        %v930 = vadd.f32 %v874, %v925
        %v931 = vld [vmem:[%s3] sm:$0xff]
        %933 = vset.pattern.permute.xlu0 0
        %934 = vperm.xlu0 %933, %v931
        %v935 = vpop.permute.xlu0 %934
        %v937 = vadd.f32 %v929, %v935
        %v938 = vadd.f32 %v930, %v935
        %v939 = vmul.f32 %v937, %v937
        %v940 = vmul.f32 %v938, %v938
        %v941 = vrot.slane %v939, 4
        %v942 = vadd.f32 %v939, %v941
        %v943 = vrot.slane %v942, 2
        %v944 = vadd.f32 %v942, %v943
        %v945 = vrot.slane %v944, 1
        %v946 = vadd.f32 %v944, %v945
        %v947 = vrot.slane %v940, 4
        %v948 = vadd.f32 %v940, %v947
        %v949 = vrot.slane %v948, 2
        %v950 = vadd.f32 %v948, %v949
        %v951 = vrot.slane %v950, 1
        %v952 = vadd.f32 %v950, %v951
        %v953 = vrcp.pop 8.0
        %v954 = vmul.f32 %v946, %v953
        %v955 = vmul.f32 %v952, %v953
        %v956 = vadd.f32 %v954, 1e-08
        %v957 = vadd.f32 %v955, 1e-08
        %v958 = vrsqrt.pop %v956
        %v959 = vrsqrt.pop %v957
        %v960 = vmul.f32 %v937, %v958
        %v961 = vmul.f32 %v938, %v959
        %vm962 = vcmp.gt.f32.partialorder %v960, 0.0
        %vm963 = vcmp.gt.f32.partialorder %v961, 0.0
        %v964 = vmul.f32 %v960, 0.2
        %v965 = vmul.f32 %v961, 0.2
        %v966 = vsel %vm962, %v960, %v964
        %v967 = vsel %vm963, %v961, %v965
        %968 = vrot.lane.b32.xlu0 %v966, 1
        %v969 = vpop.permute.xlu0 %968
        %970 = vrot.lane.b32.xlu0 %v967, 1
        %v971 = vpop.permute.xlu0 %970
        %v972 = vsel %vm322, %v969, %v971
        %v973 = vsel %vm322, %v971, %v969
        %974 = vrot.lane.b32.xlu0 %v966, 127
        %v975 = vpop.permute.xlu0 %974
        %976 = vrot.lane.b32.xlu0 %v967, 127
        %v977 = vpop.permute.xlu0 %976
        %v978 = vsel %vm329, %v975, %v977
        %v979 = vsel %vm329, %v977, %v975
        %v980 = vsel %vm341, %v978, %v973
        %v981 = vsel %vm342, %v979, %v972
        %v982 = vsel %vm354, %v973, %v978
        %v983 = vsel %vm355, %v972, %v979
        %984 = vrot.lane.b32.xlu0 %v980, 16
        %v985 = vpop.permute.xlu0 %984
        %986 = vrot.lane.b32.xlu0 %v981, 16
        %v987 = vpop.permute.xlu0 %986
        %v988 = vsel %vm362, %v985, %v987
        %v989 = vsel %vm362, %v987, %v985
        %990 = vrot.lane.b32.xlu0 %v980, 112
        %v991 = vpop.permute.xlu0 %990
        %992 = vrot.lane.b32.xlu0 %v981, 112
        %v993 = vpop.permute.xlu0 %992
        %v994 = vsel %vm369, %v991, %v993
        %v995 = vsel %vm369, %v993, %v991
        %v996 = vsel %vm381, %v994, %v989
        %v997 = vsel %vm382, %v995, %v988
        %v998 = vsel %vm394, %v989, %v994
        %v999 = vsel %vm395, %v988, %v995
        %1000 = vrot.lane.b32.xlu0 %v966, 16
        %v1001 = vpop.permute.xlu0 %1000
        %1002 = vrot.lane.b32.xlu0 %v967, 16
        %v1003 = vpop.permute.xlu0 %1002
        %v1004 = vsel %vm362, %v1001, %v1003
        %v1005 = vsel %vm362, %v1003, %v1001
        %1006 = vrot.lane.b32.xlu0 %v966, 112
        %v1007 = vpop.permute.xlu0 %1006
        %1008 = vrot.lane.b32.xlu0 %v967, 112
        %v1009 = vpop.permute.xlu0 %1008
        %v1010 = vsel %vm369, %v1007, %v1009
        %v1011 = vsel %vm369, %v1009, %v1007
        %v1012 = vsel %vm381, %v1010, %v1005
        %v1013 = vsel %vm382, %v1011, %v1004
        %v1014 = vsel %vm394, %v1005, %v1010
        %v1015 = vsel %vm395, %v1004, %v1011
        %1016 = vrot.lane.b32.xlu0 %v982, 16
        %v1017 = vpop.permute.xlu0 %1016
        %1018 = vrot.lane.b32.xlu0 %v983, 16
        %v1019 = vpop.permute.xlu0 %1018
        %v1020 = vsel %vm362, %v1017, %v1019
        %v1021 = vsel %vm362, %v1019, %v1017
        %1022 = vrot.lane.b32.xlu0 %v982, 112
        %v1023 = vpop.permute.xlu0 %1022
        %1024 = vrot.lane.b32.xlu0 %v983, 112
        %v1025 = vpop.permute.xlu0 %1024
        %v1026 = vsel %vm369, %v1023, %v1025
        %v1027 = vsel %vm369, %v1025, %v1023
        %v1028 = vsel %vm381, %v1026, %v1021
        %v1029 = vsel %vm382, %v1027, %v1020
        %v1030 = vsel %vm394, %v1021, %v1026
        %v1031 = vsel %vm395, %v1020, %v1027
        %v1032 = vld [vmem:[%s4] sm:$0xf]
        %v1033 = vpack.c.bf16 %v996, %v996
        %v1034 = vpack.c.bf16 %v997, %v997
        %s1035 = scalar_lea.vmem %s4, 4
        %v1036 = vld [vmem:[%s1035] sm:$0xf]
        %v1037 = vpack.c.bf16 %v1012, %v1012
        %v1038 = vpack.c.bf16 %v1013, %v1013
        %vm1039 = vcmask 64512
        %v1041 = vsel %vm1039, %v1036, 0
        %vm1043 = vcmask 1043456
        %v1045 = vsel %vm1043, %v1037, 0
        %v1048 = vsel %vm1043, %v1038, 0
        %1050 = vmatprep.subr.bf16.mxu0 %v1048
        %1051 = vmatpush1.bf16.msra.mxu0 %v1045
        %1052 = vmatprep.subr.bf16.mxu0 0
        %1053 = vmatpush1.bf16.msra.mxu0 0
        %1054 = vmatprep.subr.bf16.mxu0 0
        %1055 = vmatpush1.bf16.msra.mxu0 0
        %1056 = vmatprep.subr.bf16.mxu0 0
        %1057 = vmatpush1.bf16.msra.mxu0 0
        %1058 = vmatprep.subr.bf16.mxu0 0
        %1059 = vmatpush1.bf16.msra.mxu0 0
        %1060 = vmatprep.subr.bf16.mxu0 0
        %1061 = vmatpush1.bf16.msra.mxu0 0
        %1062 = vmatprep.subr.bf16.mxu0 0
        %1063 = vmatpush1.bf16.msra.mxu0 0
        %1064 = vmatprep.subr.bf16.mxu0 0
        %1065 = vmatpush1.bf16.msra.mxu0 0
        %1066 = vmatprep.subr.bf16.mxu0 0
        %1067 = vmatpush1.bf16.msra.mxu0 0
        %1068 = vmatprep.subr.bf16.mxu0 0
        %1069 = vmatpush1.bf16.msra.mxu0 0
        %1070 = vmatprep.subr.bf16.mxu0 0
        %1071 = vmatpush1.bf16.msra.mxu0 0
        %1072 = vmatprep.subr.bf16.mxu0 0
        %1073 = vmatpush1.bf16.msra.mxu0 0
        %1074 = vmatprep.subr.bf16.mxu0 0
        %1075 = vmatpush1.bf16.msra.mxu0 0
        %1076 = vmatprep.subr.bf16.mxu0 0
        %1077 = vmatpush1.bf16.msra.mxu0 0
        %1078 = vmatprep.subr.bf16.mxu0 0
        %1079 = vmatpush1.bf16.msra.mxu0 0
        %1080 = vmatprep.subr.bf16.mxu0 0
        %1081 = vmatpush1.bf16.msra.mxu0 0
        %1082 = vmatprep.mubr.bf16.mxu0 0
        %1083 = vmatmul.mubr.bf16.gmra.mrb[0].mxu0 %v1041
        %v1084 = vpop.f32.mrb[0].mxu0
        %v1085 = vadd.f32 0.0, %v1084
        %v1086 = vpop.f32.mrb[0].mxu0
        %v1087 = vadd.f32 0.0, %v1086
        %v1088 = vpop.f32.mrb[0].mxu0
        %v1089 = vpop.f32.mrb[0].mxu0
        %1090 = vdwg.mxu0
        %v1092 = vsel %vm1039, %v1032, 0
        %v1095 = vsel %vm1043, %v1033, 0
        %v1098 = vsel %vm1043, %v1034, 0
        %1100 = vmatprep.subr.bf16.mxu0 %v1098
        %1101 = vmatpush1.bf16.msra.mxu0 %v1095
        %1102 = vmatprep.subr.bf16.mxu0 0
        %1103 = vmatpush1.bf16.msra.mxu0 0
        %1104 = vmatprep.subr.bf16.mxu0 0
        %1105 = vmatpush1.bf16.msra.mxu0 0
        %1106 = vmatprep.subr.bf16.mxu0 0
        %1107 = vmatpush1.bf16.msra.mxu0 0
        %1108 = vmatprep.subr.bf16.mxu0 0
        %1109 = vmatpush1.bf16.msra.mxu0 0
        %1110 = vmatprep.subr.bf16.mxu0 0
        %1111 = vmatpush1.bf16.msra.mxu0 0
        %1112 = vmatprep.subr.bf16.mxu0 0
        %1113 = vmatpush1.bf16.msra.mxu0 0
        %1114 = vmatprep.subr.bf16.mxu0 0
        %1115 = vmatpush1.bf16.msra.mxu0 0
        %1116 = vmatprep.subr.bf16.mxu0 0
        %1117 = vmatpush1.bf16.msra.mxu0 0
        %1118 = vmatprep.subr.bf16.mxu0 0
        %1119 = vmatpush1.bf16.msra.mxu0 0
        %1120 = vmatprep.subr.bf16.mxu0 0
        %1121 = vmatpush1.bf16.msra.mxu0 0
        %1122 = vmatprep.subr.bf16.mxu0 0
        %1123 = vmatpush1.bf16.msra.mxu0 0
        %1124 = vmatprep.subr.bf16.mxu0 0
        %1125 = vmatpush1.bf16.msra.mxu0 0
        %1126 = vmatprep.subr.bf16.mxu0 0
        %1127 = vmatpush1.bf16.msra.mxu0 0
        %1128 = vmatprep.subr.bf16.mxu0 0
        %1129 = vmatpush1.bf16.msra.mxu0 0
        %1130 = vmatprep.subr.bf16.mxu0 0
        %1131 = vmatpush1.bf16.msra.mxu0 0
        %1132 = vmatprep.mubr.bf16.mxu0 0
        %1133 = vmatmul.mubr.bf16.gmra.mrb[0].mxu0 %v1092
        %v1134 = vpop.f32.mrb[0].mxu0
        %v1135 = vadd.f32 %v1085, %v1134
        %v1136 = vpop.f32.mrb[0].mxu0
        %v1137 = vadd.f32 %v1087, %v1136
        %v1138 = vpop.f32.mrb[0].mxu0
        %v1139 = vpop.f32.mrb[0].mxu0
        %1140 = vdwg.mxu0
        %s1141 = scalar_lea.vmem %s4, 8
        %v1142 = vld [vmem:[%s1141] sm:$0xf]
        %v1143 = vpack.c.bf16 %v1028, %v1028
        %v1144 = vpack.c.bf16 %v1029, %v1029
        %v1146 = vsel %vm1039, %v1142, 0
        %v1149 = vsel %vm1043, %v1143, 0
        %v1152 = vsel %vm1043, %v1144, 0
        %1154 = vmatprep.subr.bf16.mxu0 %v1152
        %1155 = vmatpush1.bf16.msra.mxu0 %v1149
        %1156 = vmatprep.subr.bf16.mxu0 0
        %1157 = vmatpush1.bf16.msra.mxu0 0
        %1158 = vmatprep.subr.bf16.mxu0 0
        %1159 = vmatpush1.bf16.msra.mxu0 0
        %1160 = vmatprep.subr.bf16.mxu0 0
        %1161 = vmatpush1.bf16.msra.mxu0 0
        %1162 = vmatprep.subr.bf16.mxu0 0
        %1163 = vmatpush1.bf16.msra.mxu0 0
        %1164 = vmatprep.subr.bf16.mxu0 0
        %1165 = vmatpush1.bf16.msra.mxu0 0
        %1166 = vmatprep.subr.bf16.mxu0 0
        %1167 = vmatpush1.bf16.msra.mxu0 0
        %1168 = vmatprep.subr.bf16.mxu0 0
        %1169 = vmatpush1.bf16.msra.mxu0 0
        %1170 = vmatprep.subr.bf16.mxu0 0
        %1171 = vmatpush1.bf16.msra.mxu0 0
        %1172 = vmatprep.subr.bf16.mxu0 0
        %1173 = vmatpush1.bf16.msra.mxu0 0
        %1174 = vmatprep.subr.bf16.mxu0 0
        %1175 = vmatpush1.bf16.msra.mxu0 0
        %1176 = vmatprep.subr.bf16.mxu0 0
        %1177 = vmatpush1.bf16.msra.mxu0 0
        %1178 = vmatprep.subr.bf16.mxu0 0
        %1179 = vmatpush1.bf16.msra.mxu0 0
        %1180 = vmatprep.subr.bf16.mxu0 0
        %1181 = vmatpush1.bf16.msra.mxu0 0
        %1182 = vmatprep.subr.bf16.mxu0 0
        %1183 = vmatpush1.bf16.msra.mxu0 0
        %1184 = vmatprep.subr.bf16.mxu0 0
        %1185 = vmatpush1.bf16.msra.mxu0 0
        %1186 = vmatprep.mubr.bf16.mxu0 0
        %1187 = vmatmul.mubr.bf16.gmra.mrb[0].mxu0 %v1146
        %v1188 = vpop.f32.mrb[0].mxu0
        %v1189 = vadd.f32 0.0, %v1188
        %v1190 = vpop.f32.mrb[0].mxu0
        %v1191 = vadd.f32 0.0, %v1190
        %v1192 = vpop.f32.mrb[0].mxu0
        %v1193 = vpop.f32.mrb[0].mxu0
        %1194 = vdwg.mxu0
        %v1195 = vadd.f32 %v1135, %v1189
        %v1196 = vadd.f32 %v1137, %v1191
        %s1197 = scalar_lea.vmem %s4, 12
        %v1198 = vld [vmem:[%s1197] sm:$0xf]
        %v1199 = vpack.c.bf16 %v980, %v980
        %v1200 = vpack.c.bf16 %v981, %v981
        %v1202 = vsel %vm1039, %v1198, 0
        %v1205 = vsel %vm1043, %v1199, 0
        %v1208 = vsel %vm1043, %v1200, 0
        %1210 = vmatprep.subr.bf16.mxu0 %v1208
        %1211 = vmatpush1.bf16.msra.mxu0 %v1205
        %1212 = vmatprep.subr.bf16.mxu0 0
        %1213 = vmatpush1.bf16.msra.mxu0 0
        %1214 = vmatprep.subr.bf16.mxu0 0
        %1215 = vmatpush1.bf16.msra.mxu0 0
        %1216 = vmatprep.subr.bf16.mxu0 0
        %1217 = vmatpush1.bf16.msra.mxu0 0
        %1218 = vmatprep.subr.bf16.mxu0 0
        %1219 = vmatpush1.bf16.msra.mxu0 0
        %1220 = vmatprep.subr.bf16.mxu0 0
        %1221 = vmatpush1.bf16.msra.mxu0 0
        %1222 = vmatprep.subr.bf16.mxu0 0
        %1223 = vmatpush1.bf16.msra.mxu0 0
        %1224 = vmatprep.subr.bf16.mxu0 0
        %1225 = vmatpush1.bf16.msra.mxu0 0
        %1226 = vmatprep.subr.bf16.mxu0 0
        %1227 = vmatpush1.bf16.msra.mxu0 0
        %1228 = vmatprep.subr.bf16.mxu0 0
        %1229 = vmatpush1.bf16.msra.mxu0 0
        %1230 = vmatprep.subr.bf16.mxu0 0
        %1231 = vmatpush1.bf16.msra.mxu0 0
        %1232 = vmatprep.subr.bf16.mxu0 0
        %1233 = vmatpush1.bf16.msra.mxu0 0
        %1234 = vmatprep.subr.bf16.mxu0 0
        %1235 = vmatpush1.bf16.msra.mxu0 0
        %1236 = vmatprep.subr.bf16.mxu0 0
        %1237 = vmatpush1.bf16.msra.mxu0 0
        %1238 = vmatprep.subr.bf16.mxu0 0
        %1239 = vmatpush1.bf16.msra.mxu0 0
        %1240 = vmatprep.subr.bf16.mxu0 0
        %1241 = vmatpush1.bf16.msra.mxu0 0
        %1242 = vmatprep.mubr.bf16.mxu0 0
        %1243 = vmatmul.mubr.bf16.gmra.mrb[0].mxu0 %v1202
        %v1244 = vpop.f32.mrb[0].mxu0
        %v1245 = vadd.f32 0.0, %v1244
        %v1246 = vpop.f32.mrb[0].mxu0
        %v1247 = vadd.f32 0.0, %v1246
        %v1248 = vpop.f32.mrb[0].mxu0
        %v1249 = vpop.f32.mrb[0].mxu0
        %1250 = vdwg.mxu0
        %v1251 = vadd.f32 %v1195, %v1245
        %v1252 = vadd.f32 %v1196, %v1247
        %s1253 = scalar_lea.vmem %s4, 16
        %v1254 = vld [vmem:[%s1253] sm:$0xf]
        %v1255 = vpack.c.bf16 %v966, %v966
        %v1256 = vpack.c.bf16 %v967, %v967
        %v1258 = vsel %vm1039, %v1254, 0
        %v1261 = vsel %vm1043, %v1255, 0
        %v1264 = vsel %vm1043, %v1256, 0
        %1266 = vmatprep.subr.bf16.mxu0 %v1264
        %1267 = vmatpush1.bf16.msra.mxu0 %v1261
        %1268 = vmatprep.subr.bf16.mxu0 0
        %1269 = vmatpush1.bf16.msra.mxu0 0
        %1270 = vmatprep.subr.bf16.mxu0 0
        %1271 = vmatpush1.bf16.msra.mxu0 0
        %1272 = vmatprep.subr.bf16.mxu0 0
        %1273 = vmatpush1.bf16.msra.mxu0 0
        %1274 = vmatprep.subr.bf16.mxu0 0
        %1275 = vmatpush1.bf16.msra.mxu0 0
        %1276 = vmatprep.subr.bf16.mxu0 0
        %1277 = vmatpush1.bf16.msra.mxu0 0
        %1278 = vmatprep.subr.bf16.mxu0 0
        %1279 = vmatpush1.bf16.msra.mxu0 0
        %1280 = vmatprep.subr.bf16.mxu0 0
        %1281 = vmatpush1.bf16.msra.mxu0 0
        %1282 = vmatprep.subr.bf16.mxu0 0
        %1283 = vmatpush1.bf16.msra.mxu0 0
        %1284 = vmatprep.subr.bf16.mxu0 0
        %1285 = vmatpush1.bf16.msra.mxu0 0
        %1286 = vmatprep.subr.bf16.mxu0 0
        %1287 = vmatpush1.bf16.msra.mxu0 0
        %1288 = vmatprep.subr.bf16.mxu0 0
        %1289 = vmatpush1.bf16.msra.mxu0 0
        %1290 = vmatprep.subr.bf16.mxu0 0
        %1291 = vmatpush1.bf16.msra.mxu0 0
        %1292 = vmatprep.subr.bf16.mxu0 0
        %1293 = vmatpush1.bf16.msra.mxu0 0
        %1294 = vmatprep.subr.bf16.mxu0 0
        %1295 = vmatpush1.bf16.msra.mxu0 0
        %1296 = vmatprep.subr.bf16.mxu0 0
        %1297 = vmatpush1.bf16.msra.mxu0 0
        %1298 = vmatprep.mubr.bf16.mxu0 0
        %1299 = vmatmul.mubr.bf16.gmra.mrb[0].mxu0 %v1258
        %v1300 = vpop.f32.mrb[0].mxu0
        %v1301 = vadd.f32 0.0, %v1300
        %v1302 = vpop.f32.mrb[0].mxu0
        %v1303 = vadd.f32 0.0, %v1302
        %v1304 = vpop.f32.mrb[0].mxu0
        %v1305 = vpop.f32.mrb[0].mxu0
        %1306 = vdwg.mxu0
        %v1307 = vadd.f32 %v1251, %v1301
        %v1308 = vadd.f32 %v1252, %v1303
        %s1309 = scalar_lea.vmem %s4, 20
        %v1310 = vld [vmem:[%s1309] sm:$0xf]
        %v1311 = vpack.c.bf16 %v982, %v982
        %v1312 = vpack.c.bf16 %v983, %v983
        %v1314 = vsel %vm1039, %v1310, 0
        %v1317 = vsel %vm1043, %v1311, 0
        %v1320 = vsel %vm1043, %v1312, 0
        %1322 = vmatprep.subr.bf16.mxu0 %v1320
        %1323 = vmatpush1.bf16.msra.mxu0 %v1317
        %1324 = vmatprep.subr.bf16.mxu0 0
        %1325 = vmatpush1.bf16.msra.mxu0 0
        %1326 = vmatprep.subr.bf16.mxu0 0
        %1327 = vmatpush1.bf16.msra.mxu0 0
        %1328 = vmatprep.subr.bf16.mxu0 0
        %1329 = vmatpush1.bf16.msra.mxu0 0
        %1330 = vmatprep.subr.bf16.mxu0 0
        %1331 = vmatpush1.bf16.msra.mxu0 0
        %1332 = vmatprep.subr.bf16.mxu0 0
        %1333 = vmatpush1.bf16.msra.mxu0 0
        %1334 = vmatprep.subr.bf16.mxu0 0
        %1335 = vmatpush1.bf16.msra.mxu0 0
        %1336 = vmatprep.subr.bf16.mxu0 0
        %1337 = vmatpush1.bf16.msra.mxu0 0
        %1338 = vmatprep.subr.bf16.mxu0 0
        %1339 = vmatpush1.bf16.msra.mxu0 0
        %1340 = vmatprep.subr.bf16.mxu0 0
        %1341 = vmatpush1.bf16.msra.mxu0 0
        %1342 = vmatprep.subr.bf16.mxu0 0
        %1343 = vmatpush1.bf16.msra.mxu0 0
        %1344 = vmatprep.subr.bf16.mxu0 0
        %1345 = vmatpush1.bf16.msra.mxu0 0
        %1346 = vmatprep.subr.bf16.mxu0 0
        %1347 = vmatpush1.bf16.msra.mxu0 0
        %1348 = vmatprep.subr.bf16.mxu0 0
        %1349 = vmatpush1.bf16.msra.mxu0 0
        %1350 = vmatprep.subr.bf16.mxu0 0
        %1351 = vmatpush1.bf16.msra.mxu0 0
        %1352 = vmatprep.subr.bf16.mxu0 0
        %1353 = vmatpush1.bf16.msra.mxu0 0
        %1354 = vmatprep.mubr.bf16.mxu0 0
        %1355 = vmatmul.mubr.bf16.gmra.mrb[0].mxu0 %v1314
        %v1356 = vpop.f32.mrb[0].mxu0
        %v1357 = vadd.f32 0.0, %v1356
        %v1358 = vpop.f32.mrb[0].mxu0
        %v1359 = vadd.f32 0.0, %v1358
        %v1360 = vpop.f32.mrb[0].mxu0
        %v1361 = vpop.f32.mrb[0].mxu0
        %1362 = vdwg.mxu0
        %v1363 = vadd.f32 %v1307, %v1357
        %v1364 = vadd.f32 %v1308, %v1359
        %s1365 = scalar_lea.vmem %s4, 24
        %v1366 = vld [vmem:[%s1365] sm:$0xf]
        %v1367 = vpack.c.bf16 %v998, %v998
        %v1368 = vpack.c.bf16 %v999, %v999
        %v1370 = vsel %vm1039, %v1366, 0
        %v1373 = vsel %vm1043, %v1367, 0
        %v1376 = vsel %vm1043, %v1368, 0
        %1378 = vmatprep.subr.bf16.mxu0 %v1376
        %1379 = vmatpush1.bf16.msra.mxu0 %v1373
        %1380 = vmatprep.subr.bf16.mxu0 0
        %1381 = vmatpush1.bf16.msra.mxu0 0
        %1382 = vmatprep.subr.bf16.mxu0 0
        %1383 = vmatpush1.bf16.msra.mxu0 0
        %1384 = vmatprep.subr.bf16.mxu0 0
        %1385 = vmatpush1.bf16.msra.mxu0 0
        %1386 = vmatprep.subr.bf16.mxu0 0
        %1387 = vmatpush1.bf16.msra.mxu0 0
        %1388 = vmatprep.subr.bf16.mxu0 0
        %1389 = vmatpush1.bf16.msra.mxu0 0
        %1390 = vmatprep.subr.bf16.mxu0 0
        %1391 = vmatpush1.bf16.msra.mxu0 0
        %1392 = vmatprep.subr.bf16.mxu0 0
        %1393 = vmatpush1.bf16.msra.mxu0 0
        %1394 = vmatprep.subr.bf16.mxu0 0
        %1395 = vmatpush1.bf16.msra.mxu0 0
        %1396 = vmatprep.subr.bf16.mxu0 0
        %1397 = vmatpush1.bf16.msra.mxu0 0
        %1398 = vmatprep.subr.bf16.mxu0 0
        %1399 = vmatpush1.bf16.msra.mxu0 0
        %1400 = vmatprep.subr.bf16.mxu0 0
        %1401 = vmatpush1.bf16.msra.mxu0 0
        %1402 = vmatprep.subr.bf16.mxu0 0
        %1403 = vmatpush1.bf16.msra.mxu0 0
        %1404 = vmatprep.subr.bf16.mxu0 0
        %1405 = vmatpush1.bf16.msra.mxu0 0
        %1406 = vmatprep.subr.bf16.mxu0 0
        %1407 = vmatpush1.bf16.msra.mxu0 0
        %1408 = vmatprep.subr.bf16.mxu0 0
        %1409 = vmatpush1.bf16.msra.mxu0 0
        %1410 = vmatprep.mubr.bf16.mxu0 0
        %1411 = vmatmul.mubr.bf16.gmra.mrb[0].mxu0 %v1370
        %v1412 = vpop.f32.mrb[0].mxu0
        %v1413 = vadd.f32 0.0, %v1412
        %v1414 = vpop.f32.mrb[0].mxu0
        %v1415 = vadd.f32 0.0, %v1414
        %v1416 = vpop.f32.mrb[0].mxu0
        %v1417 = vpop.f32.mrb[0].mxu0
        %1418 = vdwg.mxu0
        %v1419 = vadd.f32 %v1363, %v1413
        %v1420 = vadd.f32 %v1364, %v1415
        %s1421 = scalar_lea.vmem %s4, 28
        %v1422 = vld [vmem:[%s1421] sm:$0xf]
        %v1423 = vpack.c.bf16 %v1014, %v1014
        %v1424 = vpack.c.bf16 %v1015, %v1015
        %v1426 = vsel %vm1039, %v1422, 0
        %v1429 = vsel %vm1043, %v1423, 0
        %v1432 = vsel %vm1043, %v1424, 0
        %1434 = vmatprep.subr.bf16.mxu0 %v1432
        %1435 = vmatpush1.bf16.msra.mxu0 %v1429
        %1436 = vmatprep.subr.bf16.mxu0 0
        %1437 = vmatpush1.bf16.msra.mxu0 0
        %1438 = vmatprep.subr.bf16.mxu0 0
        %1439 = vmatpush1.bf16.msra.mxu0 0
        %1440 = vmatprep.subr.bf16.mxu0 0
        %1441 = vmatpush1.bf16.msra.mxu0 0
        %1442 = vmatprep.subr.bf16.mxu0 0
        %1443 = vmatpush1.bf16.msra.mxu0 0
        %1444 = vmatprep.subr.bf16.mxu0 0
        %1445 = vmatpush1.bf16.msra.mxu0 0
        %1446 = vmatprep.subr.bf16.mxu0 0
        %1447 = vmatpush1.bf16.msra.mxu0 0
        %1448 = vmatprep.subr.bf16.mxu0 0
        %1449 = vmatpush1.bf16.msra.mxu0 0
        %1450 = vmatprep.subr.bf16.mxu0 0
        %1451 = vmatpush1.bf16.msra.mxu0 0
        %1452 = vmatprep.subr.bf16.mxu0 0
        %1453 = vmatpush1.bf16.msra.mxu0 0
        %1454 = vmatprep.subr.bf16.mxu0 0
        %1455 = vmatpush1.bf16.msra.mxu0 0
        %1456 = vmatprep.subr.bf16.mxu0 0
        %1457 = vmatpush1.bf16.msra.mxu0 0
        %1458 = vmatprep.subr.bf16.mxu0 0
        %1459 = vmatpush1.bf16.msra.mxu0 0
        %1460 = vmatprep.subr.bf16.mxu0 0
        %1461 = vmatpush1.bf16.msra.mxu0 0
        %1462 = vmatprep.subr.bf16.mxu0 0
        %1463 = vmatpush1.bf16.msra.mxu0 0
        %1464 = vmatprep.subr.bf16.mxu0 0
        %1465 = vmatpush1.bf16.msra.mxu0 0
        %1466 = vmatprep.mubr.bf16.mxu0 0
        %1467 = vmatmul.mubr.bf16.gmra.mrb[0].mxu0 %v1426
        %v1468 = vpop.f32.mrb[0].mxu0
        %v1469 = vadd.f32 0.0, %v1468
        %v1470 = vpop.f32.mrb[0].mxu0
        %v1471 = vadd.f32 0.0, %v1470
        %v1472 = vpop.f32.mrb[0].mxu0
        %v1473 = vpop.f32.mrb[0].mxu0
        %1474 = vdwg.mxu0
        %v1475 = vadd.f32 %v1419, %v1469
        %v1476 = vadd.f32 %v1420, %v1471
        %s1477 = scalar_lea.vmem %s4, 32
        %v1478 = vld [vmem:[%s1477] sm:$0xf]
        %v1479 = vpack.c.bf16 %v1030, %v1030
        %v1480 = vpack.c.bf16 %v1031, %v1031
        %v1482 = vsel %vm1039, %v1478, 0
        %v1485 = vsel %vm1043, %v1479, 0
        %v1488 = vsel %vm1043, %v1480, 0
        %1490 = vmatprep.subr.bf16.mxu0 %v1488
        %1491 = vmatpush1.bf16.msra.mxu0 %v1485
        %1492 = vmatprep.subr.bf16.mxu0 0
        %1493 = vmatpush1.bf16.msra.mxu0 0
        %1494 = vmatprep.subr.bf16.mxu0 0
        %1495 = vmatpush1.bf16.msra.mxu0 0
        %1496 = vmatprep.subr.bf16.mxu0 0
        %1497 = vmatpush1.bf16.msra.mxu0 0
        %1498 = vmatprep.subr.bf16.mxu0 0
        %1499 = vmatpush1.bf16.msra.mxu0 0
        %1500 = vmatprep.subr.bf16.mxu0 0
        %1501 = vmatpush1.bf16.msra.mxu0 0
        %1502 = vmatprep.subr.bf16.mxu0 0
        %1503 = vmatpush1.bf16.msra.mxu0 0
        %1504 = vmatprep.subr.bf16.mxu0 0
        %1505 = vmatpush1.bf16.msra.mxu0 0
        %1506 = vmatprep.subr.bf16.mxu0 0
        %1507 = vmatpush1.bf16.msra.mxu0 0
        %1508 = vmatprep.subr.bf16.mxu0 0
        %1509 = vmatpush1.bf16.msra.mxu0 0
        %1510 = vmatprep.subr.bf16.mxu0 0
        %1511 = vmatpush1.bf16.msra.mxu0 0
        %1512 = vmatprep.subr.bf16.mxu0 0
        %1513 = vmatpush1.bf16.msra.mxu0 0
        %1514 = vmatprep.subr.bf16.mxu0 0
        %1515 = vmatpush1.bf16.msra.mxu0 0
        %1516 = vmatprep.subr.bf16.mxu0 0
        %1517 = vmatpush1.bf16.msra.mxu0 0
        %1518 = vmatprep.subr.bf16.mxu0 0
        %1519 = vmatpush1.bf16.msra.mxu0 0
        %1520 = vmatprep.subr.bf16.mxu0 0
        %1521 = vmatpush1.bf16.msra.mxu0 0
        %1522 = vmatprep.mubr.bf16.mxu0 0
        %1523 = vmatmul.mubr.bf16.gmra.mrb[0].mxu0 %v1482
        %v1524 = vpop.f32.mrb[0].mxu0
        %v1525 = vadd.f32 0.0, %v1524
        %v1526 = vpop.f32.mrb[0].mxu0
        %v1527 = vadd.f32 0.0, %v1526
        %v1528 = vpop.f32.mrb[0].mxu0
        %v1529 = vpop.f32.mrb[0].mxu0
        %1530 = vdwg.mxu0
        %v1531 = vadd.f32 %v1475, %v1525
        %v1532 = vadd.f32 %v1476, %v1527
        %v1533 = vld [vmem:[%s5] sm:$0xff]
        %1535 = vset.pattern.permute.xlu0 0
        %1536 = vperm.xlu0 %1535, %v1533
        %v1537 = vpop.permute.xlu0 %1536
        %v1539 = vadd.f32 %v1531, %v1537
        %v1540 = vadd.f32 %v1532, %v1537
        %v1541 = vmul.f32 %v1539, %v1539
        %v1542 = vmul.f32 %v1540, %v1540
        %v1543 = vrot.slane %v1541, 4
        %v1544 = vadd.f32 %v1541, %v1543
        %v1545 = vrot.slane %v1544, 2
        %v1546 = vadd.f32 %v1544, %v1545
        %v1547 = vrot.slane %v1546, 1
        %v1548 = vadd.f32 %v1546, %v1547
        %v1549 = vrot.slane %v1542, 4
        %v1550 = vadd.f32 %v1542, %v1549
        %v1551 = vrot.slane %v1550, 2
        %v1552 = vadd.f32 %v1550, %v1551
        %v1553 = vrot.slane %v1552, 1
        %v1554 = vadd.f32 %v1552, %v1553
        %v1555 = vmul.f32 %v1548, %v953
        %v1556 = vmul.f32 %v1554, %v953
        %v1557 = vadd.f32 %v1555, 1e-08
        %v1558 = vadd.f32 %v1556, 1e-08
        %v1559 = vrsqrt.pop %v1557
        %v1560 = vrsqrt.pop %v1558
        %v1561 = vmul.f32 %v1539, %v1559
        %v1562 = vmul.f32 %v1540, %v1560
        %vm1563 = vcmp.gt.f32.partialorder %v1561, 0.0
        %vm1564 = vcmp.gt.f32.partialorder %v1562, 0.0
        %v1565 = vmul.f32 %v1561, 0.2
        %v1566 = vmul.f32 %v1562, 0.2
        %v1567 = vsel %vm1563, %v1561, %v1565
        %v1568 = vsel %vm1564, %v1562, %v1566
        %v1569 = vld [vmem:[%s6] sm:$0xf]
        %v1570 = vld [vmem:[%s7] sm:$0xff]
        %1572 = vset.pattern.permute.xlu0 0
        %1573 = vperm.xlu0 %1572, %v1570
        %v1574 = vpop.permute.xlu0 %1573
        %v1577 = vsel %vm437, %v1569, 0
        %1579 = vmatprep.subr.bf16.mxu0 %v662
        %1580 = vmatpush1.bf16.msra.mxu0 %v659
        %1581 = vmatprep.subr.bf16.mxu0 0
        %1582 = vmatpush1.bf16.msra.mxu0 0
        %1583 = vmatprep.subr.bf16.mxu0 0
        %1584 = vmatpush1.bf16.msra.mxu0 0
        %1585 = vmatprep.subr.bf16.mxu0 0
        %1586 = vmatpush1.bf16.msra.mxu0 0
        %1587 = vmatprep.subr.bf16.mxu0 0
        %1588 = vmatpush1.bf16.msra.mxu0 0
        %1589 = vmatprep.subr.bf16.mxu0 0
        %1590 = vmatpush1.bf16.msra.mxu0 0
        %1591 = vmatprep.subr.bf16.mxu0 0
        %1592 = vmatpush1.bf16.msra.mxu0 0
        %1593 = vmatprep.subr.bf16.mxu0 0
        %1594 = vmatpush1.bf16.msra.mxu0 0
        %1595 = vmatprep.subr.bf16.mxu0 0
        %1596 = vmatpush1.bf16.msra.mxu0 0
        %1597 = vmatprep.subr.bf16.mxu0 0
        %1598 = vmatpush1.bf16.msra.mxu0 0
        %1599 = vmatprep.subr.bf16.mxu0 0
        %1600 = vmatpush1.bf16.msra.mxu0 0
        %1601 = vmatprep.subr.bf16.mxu0 0
        %1602 = vmatpush1.bf16.msra.mxu0 0
        %1603 = vmatprep.subr.bf16.mxu0 0
        %1604 = vmatpush1.bf16.msra.mxu0 0
        %1605 = vmatprep.subr.bf16.mxu0 0
        %1606 = vmatpush1.bf16.msra.mxu0 0
        %1607 = vmatprep.subr.bf16.mxu0 0
        %1608 = vmatpush1.bf16.msra.mxu0 0
        %1609 = vmatprep.subr.bf16.mxu0 0
        %1610 = vmatpush1.bf16.msra.mxu0 0
        %1611 = vmatprep.mubr.bf16.mxu0 0
        %1612 = vmatmul.mubr.bf16.gmra.mrb[0].mxu0 %v1577
        %v1613 = vpop.f32.mrb[0].mxu0
        %v1614 = vadd.f32 %v1574, %v1613
        %v1615 = vpop.f32.mrb[0].mxu0
        %v1616 = vadd.f32 %v1574, %v1615
        %v1617 = vpop.f32.mrb[0].mxu0
        %v1618 = vpop.f32.mrb[0].mxu0
        %1619 = vdwg.mxu0
        %v1620 = vadd.f32 %v1567, %v1614
        %v1621 = vadd.f32 %v1568, %v1616
        %vm1622 = vcmp.gt.f32.partialorder %v1620, 0.0
        %vm1623 = vcmp.gt.f32.partialorder %v1621, 0.0
        %v1624 = vmul.f32 %v1620, 0.2
        %v1625 = vmul.f32 %v1621, 0.2
        %v1626 = vsel %vm1622, %v1620, %v1624
        %v1627 = vsel %vm1623, %v1621, %v1625
        %1628 = vst [vmem:[%s298] sm:$0xff] %v1626
        %1629 = vst [vmem:[%s298 + $0x8] sm:$0xff] %v1627
        %s1630 = sand.u32 %s203, 1
        %s1631 = scalar_lea.sflag [#allocation3], %s1630
        %s1632 = sand.u32 %s203, 1
        %s1633 = smul.addr %s1632, 16
        %s1634 = scalar_lea.vmem [#allocation2], %s1633
        // Predicated region
        $region53: #{tpu_custom_call.1} parent=51 // pred_check
          %p1635 = pneg %p213
        $region54: #{tpu_custom_call.1} parent=51 // pred_check_branch
          %1637 = sbr.rel (%p1635) target = $region56
        $region55: #{tpu_custom_call.1} parent=51 // pred_region
          %s1639 = ssub.s32 256, 256
          %1640 = vsyncadd %s1631, %s1639
          %s1641 = smul.addr %s22, 2
          %s1642 = smul.addr %s1641, 128
          %s1643 = scalar_lea.hbm %s8, %s1642
          %s1645 = sshll.u32 %s1634, 4
          %s1646 = int_to_ptr.vmem [resolvable:$true] %s1645
          %1648 = dma.vmem_to_hbm [thread:$0]  %s1646, 256, %s1643, %s1631
        $region56: #{tpu_custom_call.1} parent=51 // pred_fallthru
          _
      $region52: #{tpu_custom_call.1} parent=5 // pred_fallthru
        _
      %p1649 = scmp.le.s32.totalorder 2, %s17
      // Predicated region
      $region57: #{tpu_custom_call.1} parent=5 // pred_check
        %p1650 = pneg %p1649
      $region58: #{tpu_custom_call.1} parent=5 // pred_check_branch
        %1652 = sbr.rel (%p1650) target = $region60
      $region59: #{tpu_custom_call.1} parent=5 // pred_region
        %s1653 = ssub.s32 %s17, 2
        // Predicated region
        $region61: #{tpu_custom_call.1} parent=59 // pred_check
          %p1654 = pneg %p219
        $region62: #{tpu_custom_call.1} parent=59 // pred_check_branch
          %1656 = sbr.rel (%p1654) target = $region64
        $region63: #{tpu_custom_call.1} parent=59 // pred_region
          %s1657 = sand.u32 %s204, 1
          %s1658 = scalar_lea.sflag [#allocation3], %s1657
          %s1659 = sand.u32 %s204, 1
          %s1660 = smul.addr %s1659, 16
          %s1661 = scalar_lea.vmem [#allocation2], %s1660
          %1662 = dma.done %s1658, 256
        $region64: #{tpu_custom_call.1} parent=59 // pred_fallthru
          _
      $region60: #{tpu_custom_call.1} parent=5 // pred_fallthru
        _
    $region6: #{tpu_custom_call.1} parent=1 // loop_footer
      %s21 = sadd.s32 1, %s17
    $region7: #{tpu_custom_call.1} parent=1 // loop_footer_branch
      %16 = sbr.rel target = $region3
    $region8: #{tpu_custom_call.1} parent=1 // loop_exit
      _
    %1663 = vsyncpa [#allocation3], 1
    %s1664 = scalar_lea.sflag [#allocation3], 1
    %1665 = vsyncpa %s1664, 1

</llo_original>
